<compile_context>
chip_gen: v7x
topology: tpu7x:2x2x1
jax: 0.10.0
libtpu: 0.0.40
codegen_flags: <defaults>
</compile_context>

<pallas_src>
import functools

import jax
import jax.numpy as jnp
from jax.experimental import pallas as pl
from jax.experimental.pallas import tpu as pltpu

_LANE = 128
_TM_DEFAULT = 512
_BN_EPS = 1e-5


def _round_up(x, m):
    return (x + m - 1) // m * m


def _pad_rows(a, m_pad):
    m = a.shape[0]
    if m_pad > m:
        a = jnp.pad(a, ((0, m_pad - m), (0, 0)))
    return a


def _choose_tm(m, k, cp, extra_cols, out_itemsize, tm_max=_TM_DEFAULT,
               tile_budget_bytes=6 * 1024 * 1024):
    """Pick the M-tile size: as large as possible while a single buffer set
    (X tile + residual/shortcut tiles + output tile) stays under the budget,
    so the double-buffered pipeline fits the default scoped-VMEM limit."""
    tm = min(tm_max, max(8, _round_up(m, 8)))

    def tile_bytes(t):
        b = t * k * 2 + t * cp * out_itemsize          # X tile (bf16) + out tile
        for cols, itemsize in extra_cols:
            b += t * cols * itemsize
        return b

    while tm > 64 and tile_bytes(tm) > tile_budget_bytes:
        tm = max(64, _round_up(tm // 2, 8))
    return tm


# ----------------------------------------------------------------------------
# Pallas kernel: fused im2col-matmul + bias [+ shortcut matmul | + residual]
#                [+ relu] [+ mask]
# ----------------------------------------------------------------------------
def _fused_conv_kernel(*refs, relu, has_mask, has_res, has_proj):
    it = iter(refs)
    x_ref = next(it)
    w_ref = next(it)
    b_ref = next(it)
    m_ref = next(it) if has_mask else None
    r_ref = next(it) if has_res else None
    if has_proj:
        sx_ref = next(it)   # shortcut im2col patches (1x1 conv)
        sw_ref = next(it)   # shortcut weights (BN scale folded)
        sb_ref = next(it)   # shortcut bias
    o_ref = next(it)

    # bf16 x bf16 -> f32 accumulation on the MXU
    y = jnp.dot(x_ref[...], w_ref[...], preferred_element_type=jnp.float32)
    y = y + b_ref[...]                                  # folded BN bias (f32)
    if has_proj:
        y = y + jnp.dot(sx_ref[...], sw_ref[...],
                        preferred_element_type=jnp.float32)
        y = y + sb_ref[...]
    if has_res:
        y = y + r_ref[...].astype(jnp.float32)          # identity shortcut
    if relu:
        y = jnp.maximum(y, 0.0)
    if has_mask:
        y = y * m_ref[...]                              # mask AFTER relu (spec order)
    o_ref[...] = y.astype(o_ref.dtype)


def _fused_conv_call(x_cols, w_pad, bias_pad, *, mask_pad=None, residual=None,
                     shortcut=None, relu, out_dtype, tm_max=_TM_DEFAULT):
    """x_cols: [M, K] im2col patches; w_pad: [K, Cp] bf16 (BN folded, lane-padded).

    `residual`  : optional [M, Cp] bf16 tensor added before the ReLU.
    `shortcut`  : optional (sx_cols [M, Ks], sw [Ks, Cp], sb [1, Cp]) for the
                  fused 1x1-projection shortcut matmul.
    Returns [M_pad, Cp]; the caller slices off row/column padding."""
    m, k = x_cols.shape
    cp = w_pad.shape[1]
    out_itemsize = jnp.dtype(out_dtype).itemsize

    extra_cols = []
    if residual is not None:
        extra_cols.append((residual.shape[1], 2))
    if shortcut is not None:
        extra_cols.append((shortcut[0].shape[1], 2))
    tm = _choose_tm(m, k, cp, extra_cols, out_itemsize, tm_max)

    m_pad = _round_up(m, tm)
    grid = (m_pad // tm,)

    x_cols = _pad_rows(x_cols, m_pad).astype(jnp.bfloat16)

    operands = [x_cols, w_pad, bias_pad]
    in_specs = [
        pl.BlockSpec((tm, k), lambda i: (i, 0)),        # X tile (M gridded, K full)
        pl.BlockSpec((k, cp), lambda i: (0, 0)),        # weights: resident, full
        pl.BlockSpec((1, cp), lambda i: (0, 0)),        # bias: resident
    ]

    has_mask = mask_pad is not None
    has_res = residual is not None
    has_proj = shortcut is not None

    flops = 2 * m_pad * k * cp
    bytes_accessed = (x_cols.size * 2 + w_pad.size * 2 + bias_pad.size * 4
                      + m_pad * cp * out_itemsize)

    if has_mask:
        operands.append(mask_pad)
        in_specs.append(pl.BlockSpec((1, cp), lambda i: (0, 0)))
        bytes_accessed += mask_pad.size * 4
    if has_res:
        residual = _pad_rows(residual, m_pad).astype(jnp.bfloat16)
        operands.append(residual)
        in_specs.append(pl.BlockSpec((tm, residual.shape[1]), lambda i: (i, 0)))
        bytes_accessed += residual.size * 2
    if has_proj:
        sx, sw, sb = shortcut
        ks = sx.shape[1]
        sx = _pad_rows(sx, m_pad).astype(jnp.bfloat16)
        operands += [sx, sw, sb]
        in_specs += [
            pl.BlockSpec((tm, ks), lambda i: (i, 0)),   # shortcut patches (M gridded)
            pl.BlockSpec((ks, cp), lambda i: (0, 0)),   # shortcut weights: resident
            pl.BlockSpec((1, cp), lambda i: (0, 0)),    # shortcut bias: resident
        ]
        flops += 2 * m_pad * ks * cp
        bytes_accessed += sx.size * 2 + sw.size * 2 + sb.size * 4

    cost = pl.CostEstimate(flops=int(flops), transcendentals=0,
                           bytes_accessed=int(bytes_accessed))

    return pl.pallas_call(
        functools.partial(_fused_conv_kernel, relu=relu, has_mask=has_mask,
                          has_res=has_res, has_proj=has_proj),
        out_shape=jax.ShapeDtypeStruct((m_pad, cp), out_dtype),
        grid=grid,
        in_specs=in_specs,
        out_specs=pl.BlockSpec((tm, cp), lambda i: (i, 0)),
        compiler_params=pltpu.CompilerParams(
            dimension_semantics=("parallel",)),
        cost_estimate=cost,
    )(*operands)


# ----------------------------------------------------------------------------
# Plain-JAX glue: im2col (bf16), parameter preparation
# ----------------------------------------------------------------------------
def _im2col(x_nhwc, k, stride, pad):
    n, h, w, c = x_nhwc.shape
    xp = jnp.pad(x_nhwc, ((0, 0), (pad, pad), (pad, pad), (0, 0)))
    ho = (h + 2 * pad - k) // stride + 1
    wo = (w + 2 * pad - k) // stride + 1
    cols = []
    for dy in range(k):
        for dx in range(k):
            cols.append(xp[:, dy:dy + stride * ho:stride,
                           dx:dx + stride * wo:stride, :])
    patches = jnp.concatenate(cols, axis=-1)            # [N, Ho, Wo, k*k*C]
    return patches.reshape(n * ho * wo, k * k * c), (n, ho, wo)


def prepare_block_params(raw, eps=_BN_EPS):
    """Fold BN into weights/bias, convert OIHW->matrix, pad Cout to 128 lanes."""
    def bn_affine(bn):
        gamma, beta, mean, var = bn
        scale = gamma / jnp.sqrt(var + eps)
        bias = beta - mean * scale
        return scale, bias

    def conv_mat(w_oihw):
        cout = w_oihw.shape[0]
        # OIHW -> [kh*kw*Cin, Cout], matching the (dy, dx, cin) im2col order.
        return jnp.transpose(w_oihw, (2, 3, 1, 0)).reshape(-1, cout)

    def pack(w_oihw, bn, mask=None):
        scale, bias = bn_affine(bn)
        w = conv_mat(w_oihw) * scale[None, :]            # fold BN scale into W
        cout = w.shape[1]
        cp = max(_LANE, _round_up(cout, _LANE))          # lane-dense output
        w = jnp.pad(w, ((0, 0), (0, cp - cout))).astype(jnp.bfloat16)
        b = jnp.pad(bias, (0, cp - cout)).reshape(1, cp).astype(jnp.float32)
        out = {"w": w, "b": b, "cout": cout}
        if mask is not None:
            out["mask"] = jnp.pad(mask, (0, cp - cout)).reshape(1, cp).astype(jnp.float32)
        return out

    params = {
        "stride": raw["stride"],
        "conv1": pack(raw["conv1_w"], raw["bn1"], raw["mask1"]),
        "conv2": pack(raw["conv2_w"], raw["bn2"], raw["mask2"]),
        "shortcut": None,
    }
    if raw["shortcut"] is not None:
        params["shortcut"] = pack(raw["shortcut"]["conv_w"], raw["shortcut"]["bn"])
    return params


# ----------------------------------------------------------------------------
# BasicBlockMask forward (NCHW in / NCHW out, like PyTorch)
# ----------------------------------------------------------------------------
def basic_block_mask_forward(params, x_nchw):
    stride = params["stride"]
    x = jnp.transpose(x_nchw, (0, 2, 3, 1)).astype(jnp.bfloat16)   # NHWC, bf16 acts
    n, h, w, cin = x.shape

    c1 = params["conv1"]
    c2 = params["conv2"]

    # conv1 -> bn1 -> relu1 -> mask1   (one fused Pallas kernel)
    cols1, (_, ho, wo) = _im2col(x, 3, stride, 1)
    m = n * ho * wo
    y1 = _fused_conv_call(cols1, c1["w"], c1["b"], mask_pad=c1["mask"],
                          relu=True, out_dtype=jnp.bfloat16)
    out1 = y1[:m, :c1["cout"]].reshape(n, ho, wo, c1["cout"])

    # conv2 -> bn2 -> (+shortcut) -> relu2 -> mask2   (one fused Pallas kernel;
    # the projection shortcut conv1x1+bn is fused in as a second matmul)
    cols2, _ = _im2col(out1, 3, 1, 1)
    cp = c2["w"].shape[1]

    if params["shortcut"] is not None:
        cs = params["shortcut"]
        cols_s, _ = _im2col(x, 1, stride, 0)                       # [M, Cin]
        y2 = _fused_conv_call(cols2, c2["w"], c2["b"], mask_pad=c2["mask"],
                              shortcut=(cols_s, cs["w"], cs["b"]),
                              relu=True, out_dtype=jnp.float32)
    else:
        # identity shortcut (stride==1, cin==planes): lane-pad channels only
        res = jnp.pad(x.reshape(m, cin), ((0, 0), (0, cp - cin)))
        y2 = _fused_conv_call(cols2, c2["w"], c2["b"], mask_pad=c2["mask"],
                              residual=res, relu=True, out_dtype=jnp.float32)

    out = y2[:m, :c2["cout"]].reshape(n, ho, wo, c2["cout"])
    return jnp.transpose(out, (0, 3, 1, 2))                        # back to NCHW


# ----------------------------------------------------------------------------
# Raw (PyTorch-style) parameter init + pure-JAX reference for verification
# ----------------------------------------------------------------------------
def init_raw_block_params(key, in_planes, planes, stride):
    ks = jax.random.split(key, 8)

    def conv(k, cout, cin, ksz):
        return 0.1 * jax.random.normal(k, (cout, cin, ksz, ksz), jnp.float32)

    def bn(k, c):
        k1, k2, k3, k4 = jax.random.split(k, 4)
        gamma = 1.0 + 0.1 * jax.random.normal(k1, (c,), jnp.float32)
        beta = 0.1 * jax.random.normal(k2, (c,), jnp.float32)
        mean = 0.1 * jax.random.normal(k3, (c,), jnp.float32)
        var = 1.0 + 0.1 * jax.random.uniform(k4, (c,), jnp.float32)
        return (gamma, beta, mean, var)

    raw = {
        "stride": stride,
        "conv1_w": conv(ks[0], planes, in_planes, 3),
        "bn1": bn(ks[1], planes),
        "mask1": 1.0 + 0.1 * jax.random.normal(ks[2], (planes,), jnp.float32),
        "conv2_w": conv(ks[3], planes, planes, 3),
        "bn2": bn(ks[4], planes),
        "mask2": 1.0 + 0.1 * jax.random.normal(ks[5], (planes,), jnp.float32),
        "shortcut": None,
    }
    if stride != 1 or in_planes != planes:
        raw["shortcut"] = {
            "conv_w": conv(ks[6], planes, in_planes, 1),
            "bn": bn(ks[7], planes),
        }
    return raw


def reference_forward(raw, x_nchw, eps=_BN_EPS):
    x = jnp.transpose(x_nchw, (0, 2, 3, 1)).astype(jnp.float32)

    def conv(a, w_oihw, stride, pad):
        return jax.lax.conv_general_dilated(
            a, jnp.transpose(w_oihw, (2, 3, 1, 0)),
            window_strides=(stride, stride), padding=((pad, pad), (pad, pad)),
            dimension_numbers=("NHWC", "HWIO", "NHWC"))

    def bn(a, p):
        gamma, beta, mean, var = p
        return (a - mean) / jnp.sqrt(var + eps) * gamma + beta

    s = raw["stride"]
    out = jnp.maximum(bn(conv(x, raw["conv1_w"], s, 1), raw["bn1"]), 0.0)
    out = out * raw["mask1"]
    out = bn(conv(out, raw["conv2_w"], 1, 1), raw["bn2"])
    if raw["shortcut"] is not None:
        sc = bn(conv(x, raw["shortcut"]["conv_w"], s, 0), raw["shortcut"]["bn"])
    else:
        sc = x
    out = jnp.maximum(out + sc, 0.0) * raw["mask2"]
    return jnp.transpose(out, (0, 3, 1, 2))


if __name__ == "__main__":
    key = jax.random.PRNGKey(0)
    k_x, k_a, k_b = jax.random.split(key, 3)
    x = jax.random.normal(k_x, (2, 16, 16, 16), jnp.float32)   # NCHW: N=2, C=16, 16x16

    configs = [
        ("identity_shortcut", init_raw_block_params(k_a, 16, 16, 1)),
        ("projection_shortcut", init_raw_block_params(k_b, 16, 32, 2)),
    ]
    for name, raw in configs:
        params = prepare_block_params(raw)
        fwd = jax.jit(lambda inp, p=params: basic_block_mask_forward(p, inp))
        out = jax.block_until_ready(fwd(x))
        ref = reference_forward(raw, x)
        assert out.shape == ref.shape, (name, out.shape, ref.shape)
        err = float(jnp.max(jnp.abs(out - ref)))
        scale = float(jnp.max(jnp.abs(ref))) + 1.0
        # bf16 matmul operands / bf16 intermediate activations -> loose tolerance.
        assert err <= 0.05 * scale, (name, err, scale)

    print("KERNEL_OK")
</pallas_src>

<mosaic_0001>
module attributes {stable_mosaic.version = 11 : i64} {
  func.func @_fused_conv_kernel(%arg0: i32, %arg1: memref<512x144xbf16, #tpu.memory_space<vmem>>, %arg2: memref<144x128xbf16, #tpu.memory_space<vmem>>, %arg3: memref<1x128xf32, #tpu.memory_space<vmem>>, %arg4: memref<1x128xf32, #tpu.memory_space<vmem>>, %arg5: memref<512x128xbf16, #tpu.memory_space<vmem>>) attributes {dimension_semantics = [#tpu.dimension_semantics<parallel>], iteration_bounds = array<i64: 1>, scalar_prefetch = 0 : i64, scratch_operands = 0 : i64, tpu.core_type = #tpu.core_type<tc>, window_params = [{transform_indices = @transform_0, window_bounds = array<i64: 512, 144>}, {pipeline_mode = #tpu.pipeline_mode<synchronous>, transform_indices = @transform_1, window_bounds = array<i64: 144, 128>}, {pipeline_mode = #tpu.pipeline_mode<synchronous>, transform_indices = @transform_2, window_bounds = array<i64: 1, 128>}, {pipeline_mode = #tpu.pipeline_mode<synchronous>, transform_indices = @transform_3, window_bounds = array<i64: 1, 128>}, {transform_indices = @transform_4, window_bounds = array<i64: 512, 128>}]} {
    %c0 = arith.constant 0 : index
    %c0_0 = arith.constant 0 : index
    %0 = vector.load %arg1[%c0, %c0_0] : memref<512x144xbf16, #tpu.memory_space<vmem>>, vector<512x144xbf16>
    %c0_1 = arith.constant 0 : index
    %c0_2 = arith.constant 0 : index
    %1 = vector.load %arg2[%c0_1, %c0_2] : memref<144x128xbf16, #tpu.memory_space<vmem>>, vector<144x128xbf16>
    %cst = arith.constant dense<0.000000e+00> : vector<512x128xf32>
    %2 = tpu.matmul %0, %1, %cst {dimension_numbers = #tpu.dot_dimension_numbers<[1], [0], [0], [1], [0, 0, 1, 1], [], []>} : vector<512x144xbf16>, vector<144x128xbf16>, vector<512x128xf32> -> vector<512x128xf32>
    %c0_3 = arith.constant 0 : index
    %c0_4 = arith.constant 0 : index
    %3 = vector.load %arg3[%c0_3, %c0_4] : memref<1x128xf32, #tpu.memory_space<vmem>>, vector<1x128xf32>
    %4 = vector.broadcast %3 : vector<1x128xf32> to vector<512x128xf32>
    %5 = arith.addf %2, %4 : vector<512x128xf32>
    %cst_5 = arith.constant 0.000000e+00 : f32
    %6 = vector.broadcast %cst_5 : f32 to vector<512x128xf32>
    %7 = arith.maximumf %5, %6 : vector<512x128xf32>
    %c0_6 = arith.constant 0 : index
    %c0_7 = arith.constant 0 : index
    %8 = vector.load %arg4[%c0_6, %c0_7] : memref<1x128xf32, #tpu.memory_space<vmem>>, vector<1x128xf32>
    %9 = vector.broadcast %8 : vector<1x128xf32> to vector<512x128xf32>
    %10 = arith.mulf %7, %9 : vector<512x128xf32>
    %11 = arith.truncf %10 : vector<512x128xf32> to vector<512x128xbf16>
    %c0_8 = arith.constant 0 : index
    %c0_9 = arith.constant 0 : index
    %12 = vector.load %arg5[%c0_8, %c0_9] : memref<512x128xbf16, #tpu.memory_space<vmem>>, vector<512x128xbf16>
    tpu.vector_store %arg5[%c0_8, %c0_9], %11 {strides = array<i32>} : memref<512x128xbf16, #tpu.memory_space<vmem>>, vector<512x128xbf16>,
    return
  }
  func.func @transform_0(%arg0: i32) -> (i32, i32) {
    %c0_i32 = arith.constant 0 : i32
    %c0_i32_0 = arith.constant 0 : i32
    return %arg0, %c0_i32 : i32, i32
  }
  func.func @transform_1(%arg0: i32) -> (i32, i32) {
    %c0_i32 = arith.constant 0 : i32
    %c0_i32_0 = arith.constant 0 : i32
    %c0_i32_1 = arith.constant 0 : i32
    return %c0_i32, %c0_i32_0 : i32, i32
  }
  func.func @transform_2(%arg0: i32) -> (i32, i32) {
    %c0_i32 = arith.constant 0 : i32
    %c0_i32_0 = arith.constant 0 : i32
    %c0_i32_1 = arith.constant 0 : i32
    return %c0_i32, %c0_i32_0 : i32, i32
  }
  func.func @transform_3(%arg0: i32) -> (i32, i32) {
    %c0_i32 = arith.constant 0 : i32
    %c0_i32_0 = arith.constant 0 : i32
    %c0_i32_1 = arith.constant 0 : i32
    return %c0_i32, %c0_i32_0 : i32, i32
  }
  func.func @transform_4(%arg0: i32) -> (i32, i32) {
    %c0_i32 = arith.constant 0 : i32
    %c0_i32_0 = arith.constant 0 : i32
    return %arg0, %c0_i32 : i32, i32
  }
}

module attributes {stable_mosaic.version = 11 : i64} {
  func.func @_fused_conv_kernel(%arg0: i32, %arg1: memref<512x144xbf16, #tpu.memory_space<vmem>>, %arg2: memref<144x128xbf16, #tpu.memory_space<vmem>>, %arg3: memref<1x128xf32, #tpu.memory_space<vmem>>, %arg4: memref<1x128xf32, #tpu.memory_space<vmem>>, %arg5: memref<512x128xbf16, #tpu.memory_space<vmem>>, %arg6: memref<512x128xf32, #tpu.memory_space<vmem>>) attributes {dimension_semantics = [#tpu.dimension_semantics<parallel>], iteration_bounds = array<i64: 1>, scalar_prefetch = 0 : i64, scratch_operands = 0 : i64, tpu.core_type = #tpu.core_type<tc>, window_params = [{transform_indices = @transform_0, window_bounds = array<i64: 512, 144>}, {pipeline_mode = #tpu.pipeline_mode<synchronous>, transform_indices = @transform_1, window_bounds = array<i64: 144, 128>}, {pipeline_mode = #tpu.pipeline_mode<synchronous>, transform_indices = @transform_2, window_bounds = array<i64: 1, 128>}, {pipeline_mode = #tpu.pipeline_mode<synchronous>, transform_indices = @transform_3, window_bounds = array<i64: 1, 128>}, {transform_indices = @transform_4, window_bounds = array<i64: 512, 128>}, {transform_indices = @transform_5, window_bounds = array<i64: 512, 128>}]} {
    %c0 = arith.constant 0 : index
    %c0_0 = arith.constant 0 : index
    %0 = vector.load %arg1[%c0, %c0_0] : memref<512x144xbf16, #tpu.memory_space<vmem>>, vector<512x144xbf16>
    %c0_1 = arith.constant 0 : index
    %c0_2 = arith.constant 0 : index
    %1 = vector.load %arg2[%c0_1, %c0_2] : memref<144x128xbf16, #tpu.memory_space<vmem>>, vector<144x128xbf16>
    %cst = arith.constant dense<0.000000e+00> : vector<512x128xf32>
    %2 = tpu.matmul %0, %1, %cst {dimension_numbers = #tpu.dot_dimension_numbers<[1], [0], [0], [1], [0, 0, 1, 1], [], []>} : vector<512x144xbf16>, vector<144x128xbf16>, vector<512x128xf32> -> vector<512x128xf32>
    %c0_3 = arith.constant 0 : index
    %c0_4 = arith.constant 0 : index
    %3 = vector.load %arg3[%c0_3, %c0_4] : memref<1x128xf32, #tpu.memory_space<vmem>>, vector<1x128xf32>
    %4 = vector.broadcast %3 : vector<1x128xf32> to vector<512x128xf32>
    %5 = arith.addf %2, %4 : vector<512x128xf32>
    %c0_5 = arith.constant 0 : index
    %c0_6 = arith.constant 0 : index
    %6 = vector.load %arg5[%c0_5, %c0_6] : memref<512x128xbf16, #tpu.memory_space<vmem>>, vector<512x128xbf16>
    %7 = arith.extf %6 : vector<512x128xbf16> to vector<512x128xf32>
    %8 = arith.addf %5, %7 : vector<512x128xf32>
    %cst_7 = arith.constant 0.000000e+00 : f32
    %9 = vector.broadcast %cst_7 : f32 to vector<512x128xf32>
    %10 = arith.maximumf %8, %9 : vector<512x128xf32>
    %c0_8 = arith.constant 0 : index
    %c0_9 = arith.constant 0 : index
    %11 = vector.load %arg4[%c0_8, %c0_9] : memref<1x128xf32, #tpu.memory_space<vmem>>, vector<1x128xf32>
    %12 = vector.broadcast %11 : vector<1x128xf32> to vector<512x128xf32>
    %13 = arith.mulf %10, %12 : vector<512x128xf32>
    %c0_10 = arith.constant 0 : index
    %c0_11 = arith.constant 0 : index
    %14 = vector.load %arg6[%c0_10, %c0_11] : memref<512x128xf32, #tpu.memory_space<vmem>>, vector<512x128xf32>
    tpu.vector_store %arg6[%c0_10, %c0_11], %13 {strides = array<i32>} : memref<512x128xf32, #tpu.memory_space<vmem>>, vector<512x128xf32>,
    return
  }
  func.func @transform_0(%arg0: i32) -> (i32, i32) {
    %c0_i32 = arith.constant 0 : i32
    %c0_i32_0 = arith.constant 0 : i32
    return %arg0, %c0_i32 : i32, i32
  }
  func.func @transform_1(%arg0: i32) -> (i32, i32) {
    %c0_i32 = arith.constant 0 : i32
    %c0_i32_0 = arith.constant 0 : i32
    %c0_i32_1 = arith.constant 0 : i32
    return %c0_i32, %c0_i32_0 : i32, i32
  }
  func.func @transform_2(%arg0: i32) -> (i32, i32) {
    %c0_i32 = arith.constant 0 : i32
    %c0_i32_0 = arith.constant 0 : i32
    %c0_i32_1 = arith.constant 0 : i32
    return %c0_i32, %c0_i32_0 : i32, i32
  }
  func.func @transform_3(%arg0: i32) -> (i32, i32) {
    %c0_i32 = arith.constant 0 : i32
    %c0_i32_0 = arith.constant 0 : i32
    %c0_i32_1 = arith.constant 0 : i32
    return %c0_i32, %c0_i32_0 : i32, i32
  }
  func.func @transform_4(%arg0: i32) -> (i32, i32) {
    %c0_i32 = arith.constant 0 : i32
    %c0_i32_0 = arith.constant 0 : i32
    return %arg0, %c0_i32 : i32, i32
  }
  func.func @transform_5(%arg0: i32) -> (i32, i32) {
    %c0_i32 = arith.constant 0 : i32
    %c0_i32_0 = arith.constant 0 : i32
    return %arg0, %c0_i32 : i32, i32
  }
}

</mosaic_0001>

<llo_original>
// kernel: _lambda_.2
$region0: #{_lambda_.2}
  #allocation0 [shape = 'u32[]', space=smem, size = 0x4, offset = 0x4, fixed_abs, tag = 'smem constant byte address 0x4 - core index']
  #allocation1 [shape = 'u32[144,128]{1,0:T(1,128)}', space=vmem, size = 0x12000, scoped, tag = 'internal scratch']
  %s0 = inlined_call_operand.vmem [shape: bf16[512,144], index: 0, kind: input, shape index: {}]
  %s1 = inlined_call_operand.vmem [shape: bf16[144,128], index: 1, kind: input, shape index: {}]
  %s2 = inlined_call_operand.vmem [shape: f32[1,128], index: 2, kind: input, shape index: {}]
  %s3 = inlined_call_operand.vmem [shape: f32[1,128], index: 3, kind: input, shape index: {}]
  %s4 = inlined_call_operand.vmem [shape: bf16[512,128], index: 4, kind: output, shape index: {}]
  %s5 = sld [smem:[#allocation0]]
  $region26: #{_lambda_.2} parent=0
    _
  %s7 = ssub.s32 1, %s5
  %s8 = scalar_select 0, %s7, %s5
  // Predicated region
  $region2: #{_lambda_.2} parent=0 // pred_check
    _
  $region3: #{_lambda_.2} parent=0 // pred_check_branch
    %10 = sbr.rel (0) target = $region5
  $region4: #{_lambda_.2} parent=0 // pred_region
    _
  $region5: #{_lambda_.2} parent=0 // pred_fallthru
    _
  // Predicated region
  $region6: #{_lambda_.2} parent=0 // pred_check
    _
  $region7: #{_lambda_.2} parent=0 // pred_check_branch
    %12 = sbr.rel (0) target = $region9
  $region8: #{_lambda_.2} parent=0 // pred_region
    _
  $region9: #{_lambda_.2} parent=0 // pred_fallthru
    _
  // Predicated region
  $region10: #{_lambda_.2} parent=0 // pred_check
    _
  $region11: #{_lambda_.2} parent=0 // pred_check_branch
    %14 = sbr.rel (0) target = $region13
  $region12: #{_lambda_.2} parent=0 // pred_region
    _
  $region13: #{_lambda_.2} parent=0 // pred_fallthru
    _
  // Predicated region
  $region14: #{_lambda_.2} parent=0 // pred_check
    _
  $region15: #{_lambda_.2} parent=0 // pred_check_branch
    %16 = sbr.rel (0) target = $region17
  $region16: #{_lambda_.2} parent=0 // pred_region
    _
  $region17: #{_lambda_.2} parent=0 // pred_fallthru
    _
  %v18 = vld [vmem:[%s0] sm:$0xff]
  %v19 = vld [vmem:[%s0 + $0x8] sm:$0xff]
  %v20 = vld [vmem:[%s0 + $0x10] sm:$0xff]
  %v21 = vld [vmem:[%s0 + $0x18] sm:$0xff]
  %v22 = vld [vmem:[%s0 + $0x20] sm:$0xff]
  %v23 = vld [vmem:[%s0 + $0x28] sm:$0xff]
  %v24 = vld [vmem:[%s0 + $0x30] sm:$0xff]
  %v25 = vld [vmem:[%s0 + $0x38] sm:$0xff]
  %v26 = vld [vmem:[%s0 + $0x40] sm:$0xff]
  %v27 = vld [vmem:[%s0 + $0x48] sm:$0xff]
  %v28 = vld [vmem:[%s0 + $0x50] sm:$0xff]
  %v29 = vld [vmem:[%s0 + $0x58] sm:$0xff]
  %v30 = vld [vmem:[%s0 + $0x60] sm:$0xff]
  %v31 = vld [vmem:[%s0 + $0x68] sm:$0xff]
  %v32 = vld [vmem:[%s0 + $0x70] sm:$0xff]
  %v33 = vld [vmem:[%s0 + $0x78] sm:$0xff]
  %v34 = vld [vmem:[%s0 + $0x80] sm:$0xff]
  %v35 = vld [vmem:[%s0 + $0x88] sm:$0xff]
  %v36 = vld [vmem:[%s0 + $0x90] sm:$0xff]
  %v37 = vld [vmem:[%s0 + $0x98] sm:$0xff]
  %v38 = vld [vmem:[%s0 + $0xa0] sm:$0xff]
  %v39 = vld [vmem:[%s0 + $0xa8] sm:$0xff]
  %v40 = vld [vmem:[%s0 + $0xb0] sm:$0xff]
  %v41 = vld [vmem:[%s0 + $0xb8] sm:$0xff]
  %v42 = vld [vmem:[%s0 + $0xc0] sm:$0xff]
  %v43 = vld [vmem:[%s0 + $0xc8] sm:$0xff]
  %v44 = vld [vmem:[%s0 + $0xd0] sm:$0xff]
  %v45 = vld [vmem:[%s0 + $0xd8] sm:$0xff]
  %v46 = vld [vmem:[%s0 + $0xe0] sm:$0xff]
  %v47 = vld [vmem:[%s0 + $0xe8] sm:$0xff]
  %v48 = vld [vmem:[%s0 + $0xf0] sm:$0xff]
  %v49 = vld [vmem:[%s0 + $0xf8] sm:$0xff]
  %v50 = vld [vmem:[%s0 + $0x100] sm:$0xff]
  %v51 = vld [vmem:[%s0 + $0x108] sm:$0xff]
  %v52 = vld [vmem:[%s0 + $0x110] sm:$0xff]
  %v53 = vld [vmem:[%s0 + $0x118] sm:$0xff]
  %v54 = vld [vmem:[%s0 + $0x120] sm:$0xff]
  %v55 = vld [vmem:[%s0 + $0x128] sm:$0xff]
  %v56 = vld [vmem:[%s0 + $0x130] sm:$0xff]
  %v57 = vld [vmem:[%s0 + $0x138] sm:$0xff]
  %v58 = vld [vmem:[%s0 + $0x140] sm:$0xff]
  %v59 = vld [vmem:[%s0 + $0x148] sm:$0xff]
  %v60 = vld [vmem:[%s0 + $0x150] sm:$0xff]
  %v61 = vld [vmem:[%s0 + $0x158] sm:$0xff]
  %v62 = vld [vmem:[%s0 + $0x160] sm:$0xff]
  %v63 = vld [vmem:[%s0 + $0x168] sm:$0xff]
  %v64 = vld [vmem:[%s0 + $0x170] sm:$0xff]
  %v65 = vld [vmem:[%s0 + $0x178] sm:$0xff]
  %v66 = vld [vmem:[%s0 + $0x180] sm:$0xff]
  %v67 = vld [vmem:[%s0 + $0x188] sm:$0xff]
  %v68 = vld [vmem:[%s0 + $0x190] sm:$0xff]
  %v69 = vld [vmem:[%s0 + $0x198] sm:$0xff]
  %v70 = vld [vmem:[%s0 + $0x1a0] sm:$0xff]
  %v71 = vld [vmem:[%s0 + $0x1a8] sm:$0xff]
  %v72 = vld [vmem:[%s0 + $0x1b0] sm:$0xff]
  %v73 = vld [vmem:[%s0 + $0x1b8] sm:$0xff]
  %v74 = vld [vmem:[%s0 + $0x1c0] sm:$0xff]
  %v75 = vld [vmem:[%s0 + $0x1c8] sm:$0xff]
  %v76 = vld [vmem:[%s0 + $0x1d0] sm:$0xff]
  %v77 = vld [vmem:[%s0 + $0x1d8] sm:$0xff]
  %v78 = vld [vmem:[%s0 + $0x1e0] sm:$0xff]
  %v79 = vld [vmem:[%s0 + $0x1e8] sm:$0xff]
  %v80 = vld [vmem:[%s0 + $0x1f0] sm:$0xff]
  %v81 = vld [vmem:[%s0 + $0x1f8] sm:$0xff]
  %v82 = vld [vmem:[%s1] sm:$0xf]
  %v83 = vld [vmem:[%s1 + $0x4] sm:$0xf]
  %v84 = vld [vmem:[%s1 + $0x8] sm:$0xf]
  %v85 = vld [vmem:[%s1 + $0xc] sm:$0xf]
  %v86 = vld [vmem:[%s1 + $0x10] sm:$0xf]
  %v87 = vld [vmem:[%s1 + $0x14] sm:$0xf]
  %v88 = vld [vmem:[%s1 + $0x18] sm:$0xf]
  %v89 = vld [vmem:[%s1 + $0x1c] sm:$0xf]
  %v90 = vld [vmem:[%s1 + $0x20] sm:$0xf]
  %v91 = vld [vmem:[%s1 + $0x24] sm:$0xf]
  %v92 = vld [vmem:[%s1 + $0x28] sm:$0xf]
  %v93 = vld [vmem:[%s1 + $0x2c] sm:$0xf]
  %v94 = vld [vmem:[%s1 + $0x30] sm:$0xf]
  %v95 = vld [vmem:[%s1 + $0x34] sm:$0xf]
  %v96 = vld [vmem:[%s1 + $0x38] sm:$0xf]
  %v97 = vld [vmem:[%s1 + $0x3c] sm:$0xf]
  %v98 = vld [vmem:[%s1 + $0x40] sm:$0xf]
  %v99 = vld [vmem:[%s1 + $0x44] sm:$0xf]
  %v100 = vld [vmem:[%s2] sm:$0x1]
  %v102 = vlaneseq
  %v103 = vshrl.u32 %v102, 7
  %v104 = vsub.s32 0, %v103
  %v105 = vrot.slane %v100, %v104
  %v171 = vunpack.c.l.b16 %v18
  %v172 = vunpack.c.h.b16 %v18
  %v173 = vunpack.c.l.b16 %v19
  %v174 = vunpack.c.h.b16 %v19
  %v175 = vunpack.c.l.b16 %v20
  %v176 = vunpack.c.h.b16 %v20
  %v177 = vunpack.c.l.b16 %v21
  %v178 = vunpack.c.h.b16 %v21
  %v179 = vunpack.c.l.b16 %v22
  %v180 = vunpack.c.h.b16 %v22
  %v181 = vunpack.c.l.b16 %v23
  %v182 = vunpack.c.h.b16 %v23
  %v183 = vunpack.c.l.b16 %v24
  %v184 = vunpack.c.h.b16 %v24
  %v185 = vunpack.c.l.b16 %v25
  %v186 = vunpack.c.h.b16 %v25
  %v187 = vunpack.c.l.b16 %v26
  %v188 = vunpack.c.h.b16 %v26
  %v189 = vunpack.c.l.b16 %v27
  %v190 = vunpack.c.h.b16 %v27
  %v191 = vunpack.c.l.b16 %v28
  %v192 = vunpack.c.h.b16 %v28
  %v193 = vunpack.c.l.b16 %v29
  %v194 = vunpack.c.h.b16 %v29
  %v195 = vunpack.c.l.b16 %v30
  %v196 = vunpack.c.h.b16 %v30
  %v197 = vunpack.c.l.b16 %v31
  %v198 = vunpack.c.h.b16 %v31
  %v199 = vunpack.c.l.b16 %v32
  %v200 = vunpack.c.h.b16 %v32
  %v201 = vunpack.c.l.b16 %v33
  %v202 = vunpack.c.h.b16 %v33
  %v203 = vunpack.c.l.b16 %v34
  %v204 = vunpack.c.h.b16 %v34
  %v205 = vunpack.c.l.b16 %v35
  %v206 = vunpack.c.h.b16 %v35
  %v207 = vunpack.c.l.b16 %v36
  %v208 = vunpack.c.h.b16 %v36
  %v209 = vunpack.c.l.b16 %v37
  %v210 = vunpack.c.h.b16 %v37
  %v211 = vunpack.c.l.b16 %v38
  %v212 = vunpack.c.h.b16 %v38
  %v213 = vunpack.c.l.b16 %v39
  %v214 = vunpack.c.h.b16 %v39
  %v215 = vunpack.c.l.b16 %v40
  %v216 = vunpack.c.h.b16 %v40
  %v217 = vunpack.c.l.b16 %v41
  %v218 = vunpack.c.h.b16 %v41
  %v219 = vunpack.c.l.b16 %v42
  %v220 = vunpack.c.h.b16 %v42
  %v221 = vunpack.c.l.b16 %v43
  %v222 = vunpack.c.h.b16 %v43
  %v223 = vunpack.c.l.b16 %v44
  %v224 = vunpack.c.h.b16 %v44
  %v225 = vunpack.c.l.b16 %v45
  %v226 = vunpack.c.h.b16 %v45
  %v227 = vunpack.c.l.b16 %v46
  %v228 = vunpack.c.h.b16 %v46
  %v229 = vunpack.c.l.b16 %v47
  %v230 = vunpack.c.h.b16 %v47
  %v231 = vunpack.c.l.b16 %v48
  %v232 = vunpack.c.h.b16 %v48
  %v233 = vunpack.c.l.b16 %v49
  %v234 = vunpack.c.h.b16 %v49
  %v235 = vunpack.c.l.b16 %v50
  %v236 = vunpack.c.h.b16 %v50
  %v237 = vunpack.c.l.b16 %v51
  %v238 = vunpack.c.h.b16 %v51
  %v239 = vunpack.c.l.b16 %v52
  %v240 = vunpack.c.h.b16 %v52
  %v241 = vunpack.c.l.b16 %v53
  %v242 = vunpack.c.h.b16 %v53
  %v243 = vunpack.c.l.b16 %v54
  %v244 = vunpack.c.h.b16 %v54
  %v245 = vunpack.c.l.b16 %v55
  %v246 = vunpack.c.h.b16 %v55
  %v247 = vunpack.c.l.b16 %v56
  %v248 = vunpack.c.h.b16 %v56
  %v249 = vunpack.c.l.b16 %v57
  %v250 = vunpack.c.h.b16 %v57
  %v251 = vunpack.c.l.b16 %v58
  %v252 = vunpack.c.h.b16 %v58
  %v253 = vunpack.c.l.b16 %v59
  %v254 = vunpack.c.h.b16 %v59
  %v255 = vunpack.c.l.b16 %v60
  %v256 = vunpack.c.h.b16 %v60
  %v257 = vunpack.c.l.b16 %v61
  %v258 = vunpack.c.h.b16 %v61
  %v259 = vunpack.c.l.b16 %v62
  %v260 = vunpack.c.h.b16 %v62
  %v261 = vunpack.c.l.b16 %v63
  %v262 = vunpack.c.h.b16 %v63
  %v263 = vunpack.c.l.b16 %v64
  %v264 = vunpack.c.h.b16 %v64
  %v265 = vunpack.c.l.b16 %v65
  %v266 = vunpack.c.h.b16 %v65
  %v267 = vunpack.c.l.b16 %v66
  %v268 = vunpack.c.h.b16 %v66
  %v269 = vunpack.c.l.b16 %v67
  %v270 = vunpack.c.h.b16 %v67
  %v271 = vunpack.c.l.b16 %v68
  %v272 = vunpack.c.h.b16 %v68
  %v273 = vunpack.c.l.b16 %v69
  %v274 = vunpack.c.h.b16 %v69
  %v275 = vunpack.c.l.b16 %v70
  %v276 = vunpack.c.h.b16 %v70
  %v277 = vunpack.c.l.b16 %v71
  %v278 = vunpack.c.h.b16 %v71
  %v279 = vunpack.c.l.b16 %v72
  %v280 = vunpack.c.h.b16 %v72
  %v281 = vunpack.c.l.b16 %v73
  %v282 = vunpack.c.h.b16 %v73
  %v283 = vunpack.c.l.b16 %v74
  %v284 = vunpack.c.h.b16 %v74
  %v285 = vunpack.c.l.b16 %v75
  %v286 = vunpack.c.h.b16 %v75
  %v287 = vunpack.c.l.b16 %v76
  %v288 = vunpack.c.h.b16 %v76
  %v289 = vunpack.c.l.b16 %v77
  %v290 = vunpack.c.h.b16 %v77
  %v291 = vunpack.c.l.b16 %v78
  %v292 = vunpack.c.h.b16 %v78
  %v293 = vunpack.c.l.b16 %v79
  %v294 = vunpack.c.h.b16 %v79
  %v295 = vunpack.c.l.b16 %v80
  %v296 = vunpack.c.h.b16 %v80
  %v297 = vunpack.c.l.b16 %v81
  %v298 = vunpack.c.h.b16 %v81
  %v299 = vpack.c.b16 %v173, %v171
  %v300 = vpack.c.b16 %v174, %v172
  %v301 = vpack.c.b16 %v177, %v175
  %v302 = vpack.c.b16 %v178, %v176
  %v303 = vpack.c.b16 %v181, %v179
  %v304 = vpack.c.b16 %v182, %v180
  %v305 = vpack.c.b16 %v185, %v183
  %v306 = vpack.c.b16 %v186, %v184
  %v307 = vpack.c.b16 %v189, %v187
  %v308 = vpack.c.b16 %v190, %v188
  %v309 = vpack.c.b16 %v193, %v191
  %v310 = vpack.c.b16 %v194, %v192
  %v311 = vpack.c.b16 %v197, %v195
  %v312 = vpack.c.b16 %v198, %v196
  %v313 = vpack.c.b16 %v201, %v199
  %v314 = vpack.c.b16 %v202, %v200
  %v315 = vpack.c.b16 %v205, %v203
  %v316 = vpack.c.b16 %v206, %v204
  %v317 = vpack.c.b16 %v209, %v207
  %v318 = vpack.c.b16 %v210, %v208
  %v319 = vpack.c.b16 %v213, %v211
  %v320 = vpack.c.b16 %v214, %v212
  %v321 = vpack.c.b16 %v217, %v215
  %v322 = vpack.c.b16 %v218, %v216
  %v323 = vpack.c.b16 %v221, %v219
  %v324 = vpack.c.b16 %v222, %v220
  %v325 = vpack.c.b16 %v225, %v223
  %v326 = vpack.c.b16 %v226, %v224
  %v327 = vpack.c.b16 %v229, %v227
  %v328 = vpack.c.b16 %v230, %v228
  %v329 = vpack.c.b16 %v233, %v231
  %v330 = vpack.c.b16 %v234, %v232
  %v331 = vpack.c.b16 %v237, %v235
  %v332 = vpack.c.b16 %v238, %v236
  %v333 = vpack.c.b16 %v241, %v239
  %v334 = vpack.c.b16 %v242, %v240
  %v335 = vpack.c.b16 %v245, %v243
  %v336 = vpack.c.b16 %v246, %v244
  %v337 = vpack.c.b16 %v249, %v247
  %v338 = vpack.c.b16 %v250, %v248
  %v339 = vpack.c.b16 %v253, %v251
  %v340 = vpack.c.b16 %v254, %v252
  %v341 = vpack.c.b16 %v257, %v255
  %v342 = vpack.c.b16 %v258, %v256
  %v343 = vpack.c.b16 %v261, %v259
  %v344 = vpack.c.b16 %v262, %v260
  %v345 = vpack.c.b16 %v265, %v263
  %v346 = vpack.c.b16 %v266, %v264
  %v347 = vpack.c.b16 %v269, %v267
  %v348 = vpack.c.b16 %v270, %v268
  %v349 = vpack.c.b16 %v273, %v271
  %v350 = vpack.c.b16 %v274, %v272
  %v351 = vpack.c.b16 %v277, %v275
  %v352 = vpack.c.b16 %v278, %v276
  %v353 = vpack.c.b16 %v281, %v279
  %v354 = vpack.c.b16 %v282, %v280
  %v355 = vpack.c.b16 %v285, %v283
  %v356 = vpack.c.b16 %v286, %v284
  %v357 = vpack.c.b16 %v289, %v287
  %v358 = vpack.c.b16 %v290, %v288
  %v359 = vpack.c.b16 %v293, %v291
  %v360 = vpack.c.b16 %v294, %v292
  %v361 = vpack.c.b16 %v297, %v295
  %v362 = vpack.c.b16 %v298, %v296
  %v413 = vunpack.c.l.b16 %v82
  %v414 = vunpack.c.l.b16 %v83
  %v415 = vunpack.c.l.b16 %v84
  %v416 = vunpack.c.l.b16 %v85
  %v417 = vunpack.c.l.b16 %v86
  %v418 = vunpack.c.l.b16 %v87
  %v419 = vunpack.c.l.b16 %v88
  %v420 = vunpack.c.l.b16 %v89
  %v421 = vunpack.c.l.b16 %v90
  %v422 = vunpack.c.l.b16 %v91
  %v423 = vunpack.c.l.b16 %v92
  %v424 = vunpack.c.l.b16 %v93
  %v425 = vunpack.c.l.b16 %v94
  %v426 = vunpack.c.l.b16 %v95
  %v427 = vunpack.c.l.b16 %v96
  %v428 = vunpack.c.l.b16 %v97
  %v429 = vunpack.c.l.b16 %v98
  %v430 = vunpack.c.l.b16 %v99
  %v431 = vpack.c.b16 %v414, %v413
  %v432 = vpack.c.b16 %v416, %v415
  %v433 = vpack.c.b16 %v418, %v417
  %v434 = vpack.c.b16 %v420, %v419
  %v435 = vpack.c.b16 %v422, %v421
  %v436 = vpack.c.b16 %v424, %v423
  %v437 = vpack.c.b16 %v426, %v425
  %v438 = vpack.c.b16 %v428, %v427
  %v439 = vpack.c.b16 %v430, %v429
  %vm449 = vcmask 130048
  %v451 = vsel %vm449, %v300, 0
  %v454 = vsel %vm449, %v302, 0
  %v457 = vsel %vm449, %v304, 0
  %v460 = vsel %vm449, %v306, 0
  %v463 = vsel %vm449, %v308, 0
  %v466 = vsel %vm449, %v310, 0
  %v469 = vsel %vm449, %v312, 0
  %v472 = vsel %vm449, %v314, 0
  %v475 = vsel %vm449, %v316, 0
  %v478 = vsel %vm449, %v318, 0
  %v481 = vsel %vm449, %v320, 0
  %v484 = vsel %vm449, %v322, 0
  %v487 = vsel %vm449, %v324, 0
  %v490 = vsel %vm449, %v326, 0
  %v493 = vsel %vm449, %v328, 0
  %v496 = vsel %vm449, %v330, 0
  %v499 = vsel %vm449, %v332, 0
  %v502 = vsel %vm449, %v334, 0
  %v505 = vsel %vm449, %v336, 0
  %v508 = vsel %vm449, %v338, 0
  %v511 = vsel %vm449, %v340, 0
  %v514 = vsel %vm449, %v342, 0
  %v517 = vsel %vm449, %v344, 0
  %v520 = vsel %vm449, %v346, 0
  %v523 = vsel %vm449, %v348, 0
  %v526 = vsel %vm449, %v350, 0
  %v529 = vsel %vm449, %v352, 0
  %v532 = vsel %vm449, %v354, 0
  %v535 = vsel %vm449, %v356, 0
  %v538 = vsel %vm449, %v358, 0
  %v541 = vsel %vm449, %v360, 0
  %v544 = vsel %vm449, %v362, 0
  %546 = vmatprep.subr.bf16.mxu0 0
  %547 = vmatpush1.bf16.msra.mxu0 %v431
  %548 = vmatprep.subr.bf16.mxu0 0
  %549 = vmatpush1.bf16.msra.mxu0 %v432
  %550 = vmatprep.subr.bf16.mxu0 0
  %551 = vmatpush1.bf16.msra.mxu0 %v433
  %552 = vmatprep.subr.bf16.mxu0 0
  %553 = vmatpush1.bf16.msra.mxu0 %v434
  %554 = vmatprep.subr.bf16.mxu0 0
  %555 = vmatpush1.bf16.msra.mxu0 %v435
  %556 = vmatprep.subr.bf16.mxu0 0
  %557 = vmatpush1.bf16.msra.mxu0 %v436
  %558 = vmatprep.subr.bf16.mxu0 0
  %559 = vmatpush1.bf16.msra.mxu0 %v437
  %560 = vmatprep.subr.bf16.mxu0 0
  %561 = vmatpush1.bf16.msra.mxu0 %v438
  %562 = vmatprep.subr.bf16.mxu0 0
  %563 = vmatpush1.bf16.msra.mxu0 %v439
  %564 = vmatprep.subr.bf16.mxu0 0
  %565 = vmatpush1.bf16.msra.mxu0 0
  %566 = vmatprep.subr.bf16.mxu0 0
  %567 = vmatpush1.bf16.msra.mxu0 0
  %568 = vmatprep.subr.bf16.mxu0 0
  %569 = vmatpush1.bf16.msra.mxu0 0
  %570 = vmatprep.subr.bf16.mxu0 0
  %571 = vmatpush1.bf16.msra.mxu0 0
  %572 = vmatprep.subr.bf16.mxu0 0
  %573 = vmatpush1.bf16.msra.mxu0 0
  %574 = vmatprep.subr.bf16.mxu0 0
  %575 = vmatpush1.bf16.msra.mxu0 0
  %576 = vmatprep.subr.bf16.mxu0 0
  %577 = vmatpush1.bf16.msra.mxu0 0
  %578 = vmatprep.mubr.bf16.mxu0 %v451
  %579 = vmatmul.mubr.bf16.gmra.mrb[0].mxu0 %v299
  %v580 = vpop.f32.mrb[0].mxu0
  %v581 = vadd.f32 %v105, %v580
  %v582 = vpop.f32.mrb[0].mxu0
  %v583 = vpop.f32.mrb[0].mxu0
  %v584 = vadd.f32 %v105, %v583
  %v585 = vpop.f32.mrb[0].mxu0
  %586 = vmatprep.mubr.bf16.mxu0 %v454
  %587 = vmatmul.mubr.bf16.gmra.mrb[0].mxu0 %v301
  %v588 = vpop.f32.mrb[0].mxu0
  %v589 = vadd.f32 %v105, %v588
  %v590 = vpop.f32.mrb[0].mxu0
  %v591 = vpop.f32.mrb[0].mxu0
  %v592 = vadd.f32 %v105, %v591
  %v593 = vpop.f32.mrb[0].mxu0
  %594 = vmatprep.mubr.bf16.mxu0 %v457
  %595 = vmatmul.mubr.bf16.gmra.mrb[0].mxu0 %v303
  %v596 = vpop.f32.mrb[0].mxu0
  %v597 = vadd.f32 %v105, %v596
  %v598 = vpop.f32.mrb[0].mxu0
  %v599 = vpop.f32.mrb[0].mxu0
  %v600 = vadd.f32 %v105, %v599
  %v601 = vpop.f32.mrb[0].mxu0
  %602 = vmatprep.mubr.bf16.mxu0 %v460
  %603 = vmatmul.mubr.bf16.gmra.mrb[0].mxu0 %v305
  %v604 = vpop.f32.mrb[0].mxu0
  %v605 = vadd.f32 %v105, %v604
  %v606 = vpop.f32.mrb[0].mxu0
  %v607 = vpop.f32.mrb[0].mxu0
  %v608 = vadd.f32 %v105, %v607
  %v609 = vpop.f32.mrb[0].mxu0
  %610 = vmatprep.mubr.bf16.mxu0 %v463
  %611 = vmatmul.mubr.bf16.gmra.mrb[0].mxu0 %v307
  %v612 = vpop.f32.mrb[0].mxu0
  %v613 = vadd.f32 %v105, %v612
  %v614 = vpop.f32.mrb[0].mxu0
  %v615 = vpop.f32.mrb[0].mxu0
  %v616 = vadd.f32 %v105, %v615
  %v617 = vpop.f32.mrb[0].mxu0
  %618 = vmatprep.mubr.bf16.mxu0 %v466
  %619 = vmatmul.mubr.bf16.gmra.mrb[0].mxu0 %v309
  %v620 = vpop.f32.mrb[0].mxu0
  %v621 = vadd.f32 %v105, %v620
  %v622 = vpop.f32.mrb[0].mxu0
  %v623 = vpop.f32.mrb[0].mxu0
  %v624 = vadd.f32 %v105, %v623
  %v625 = vpop.f32.mrb[0].mxu0
  %626 = vmatprep.mubr.bf16.mxu0 %v469
  %627 = vmatmul.mubr.bf16.gmra.mrb[0].mxu0 %v311
  %v628 = vpop.f32.mrb[0].mxu0
  %v629 = vadd.f32 %v105, %v628
  %v630 = vpop.f32.mrb[0].mxu0
  %v631 = vpop.f32.mrb[0].mxu0
  %v632 = vadd.f32 %v105, %v631
  %v633 = vpop.f32.mrb[0].mxu0
  %634 = vmatprep.mubr.bf16.mxu0 %v472
  %635 = vmatmul.mubr.bf16.gmra.mrb[0].mxu0 %v313
  %v636 = vpop.f32.mrb[0].mxu0
  %v637 = vadd.f32 %v105, %v636
  %v638 = vpop.f32.mrb[0].mxu0
  %v639 = vpop.f32.mrb[0].mxu0
  %v640 = vadd.f32 %v105, %v639
  %v641 = vpop.f32.mrb[0].mxu0
  %642 = vmatprep.mubr.bf16.mxu0 %v475
  %643 = vmatmul.mubr.bf16.gmra.mrb[0].mxu0 %v315
  %v644 = vpop.f32.mrb[0].mxu0
  %v645 = vadd.f32 %v105, %v644
  %v646 = vpop.f32.mrb[0].mxu0
  %v647 = vpop.f32.mrb[0].mxu0
  %v648 = vadd.f32 %v105, %v647
  %v649 = vpop.f32.mrb[0].mxu0
  %650 = vmatprep.mubr.bf16.mxu0 %v478
  %651 = vmatmul.mubr.bf16.gmra.mrb[0].mxu0 %v317
  %v652 = vpop.f32.mrb[0].mxu0
  %v653 = vadd.f32 %v105, %v652
  %v654 = vpop.f32.mrb[0].mxu0
  %v655 = vpop.f32.mrb[0].mxu0
  %v656 = vadd.f32 %v105, %v655
  %v657 = vpop.f32.mrb[0].mxu0
  %658 = vmatprep.mubr.bf16.mxu0 %v481
  %659 = vmatmul.mubr.bf16.gmra.mrb[0].mxu0 %v319
  %v660 = vpop.f32.mrb[0].mxu0
  %v661 = vadd.f32 %v105, %v660
  %v662 = vpop.f32.mrb[0].mxu0
  %v663 = vpop.f32.mrb[0].mxu0
  %v664 = vadd.f32 %v105, %v663
  %v665 = vpop.f32.mrb[0].mxu0
  %666 = vmatprep.mubr.bf16.mxu0 %v484
  %667 = vmatmul.mubr.bf16.gmra.mrb[0].mxu0 %v321
  %v668 = vpop.f32.mrb[0].mxu0
  %v669 = vadd.f32 %v105, %v668
  %v670 = vpop.f32.mrb[0].mxu0
  %v671 = vpop.f32.mrb[0].mxu0
  %v672 = vadd.f32 %v105, %v671
  %v673 = vpop.f32.mrb[0].mxu0
  %674 = vmatprep.mubr.bf16.mxu0 %v487
  %675 = vmatmul.mubr.bf16.gmra.mrb[0].mxu0 %v323
  %v676 = vpop.f32.mrb[0].mxu0
  %v677 = vadd.f32 %v105, %v676
  %v678 = vpop.f32.mrb[0].mxu0
  %v679 = vpop.f32.mrb[0].mxu0
  %v680 = vadd.f32 %v105, %v679
  %v681 = vpop.f32.mrb[0].mxu0
  %682 = vmatprep.mubr.bf16.mxu0 %v490
  %683 = vmatmul.mubr.bf16.gmra.mrb[0].mxu0 %v325
  %v684 = vpop.f32.mrb[0].mxu0
  %v685 = vadd.f32 %v105, %v684
  %v686 = vpop.f32.mrb[0].mxu0
  %v687 = vpop.f32.mrb[0].mxu0
  %v688 = vadd.f32 %v105, %v687
  %v689 = vpop.f32.mrb[0].mxu0
  %690 = vmatprep.mubr.bf16.mxu0 %v493
  %691 = vmatmul.mubr.bf16.gmra.mrb[0].mxu0 %v327
  %v692 = vpop.f32.mrb[0].mxu0
  %v693 = vadd.f32 %v105, %v692
  %v694 = vpop.f32.mrb[0].mxu0
  %v695 = vpop.f32.mrb[0].mxu0
  %v696 = vadd.f32 %v105, %v695
  %v697 = vpop.f32.mrb[0].mxu0
  %698 = vmatprep.mubr.bf16.mxu0 %v496
  %699 = vmatmul.mubr.bf16.gmra.mrb[0].mxu0 %v329
  %v700 = vpop.f32.mrb[0].mxu0
  %v701 = vadd.f32 %v105, %v700
  %v702 = vpop.f32.mrb[0].mxu0
  %v703 = vpop.f32.mrb[0].mxu0
  %v704 = vadd.f32 %v105, %v703
  %v705 = vpop.f32.mrb[0].mxu0
  %706 = vmatprep.mubr.bf16.mxu0 %v499
  %707 = vmatmul.mubr.bf16.gmra.mrb[0].mxu0 %v331
  %v708 = vpop.f32.mrb[0].mxu0
  %v709 = vadd.f32 %v105, %v708
  %v710 = vpop.f32.mrb[0].mxu0
  %v711 = vpop.f32.mrb[0].mxu0
  %v712 = vadd.f32 %v105, %v711
  %v713 = vpop.f32.mrb[0].mxu0
  %714 = vmatprep.mubr.bf16.mxu0 %v502
  %715 = vmatmul.mubr.bf16.gmra.mrb[0].mxu0 %v333
  %v716 = vpop.f32.mrb[0].mxu0
  %v717 = vadd.f32 %v105, %v716
  %v718 = vpop.f32.mrb[0].mxu0
  %v719 = vpop.f32.mrb[0].mxu0
  %v720 = vadd.f32 %v105, %v719
  %v721 = vpop.f32.mrb[0].mxu0
  %722 = vmatprep.mubr.bf16.mxu0 %v505
  %723 = vmatmul.mubr.bf16.gmra.mrb[0].mxu0 %v335
  %v724 = vpop.f32.mrb[0].mxu0
  %v725 = vadd.f32 %v105, %v724
  %v726 = vpop.f32.mrb[0].mxu0
  %v727 = vpop.f32.mrb[0].mxu0
  %v728 = vadd.f32 %v105, %v727
  %v729 = vpop.f32.mrb[0].mxu0
  %730 = vmatprep.mubr.bf16.mxu0 %v508
  %731 = vmatmul.mubr.bf16.gmra.mrb[0].mxu0 %v337
  %v732 = vpop.f32.mrb[0].mxu0
  %v733 = vadd.f32 %v105, %v732
  %v734 = vpop.f32.mrb[0].mxu0
  %v735 = vpop.f32.mrb[0].mxu0
  %v736 = vadd.f32 %v105, %v735
  %v737 = vpop.f32.mrb[0].mxu0
  %738 = vmatprep.mubr.bf16.mxu0 %v511
  %739 = vmatmul.mubr.bf16.gmra.mrb[0].mxu0 %v339
  %v740 = vpop.f32.mrb[0].mxu0
  %v741 = vadd.f32 %v105, %v740
  %v742 = vpop.f32.mrb[0].mxu0
  %v743 = vpop.f32.mrb[0].mxu0
  %v744 = vadd.f32 %v105, %v743
  %v745 = vpop.f32.mrb[0].mxu0
  %746 = vmatprep.mubr.bf16.mxu0 %v514
  %747 = vmatmul.mubr.bf16.gmra.mrb[0].mxu0 %v341
  %v748 = vpop.f32.mrb[0].mxu0
  %v749 = vadd.f32 %v105, %v748
  %v750 = vpop.f32.mrb[0].mxu0
  %v751 = vpop.f32.mrb[0].mxu0
  %v752 = vadd.f32 %v105, %v751
  %v753 = vpop.f32.mrb[0].mxu0
  %754 = vmatprep.mubr.bf16.mxu0 %v517
  %755 = vmatmul.mubr.bf16.gmra.mrb[0].mxu0 %v343
  %v756 = vpop.f32.mrb[0].mxu0
  %v757 = vadd.f32 %v105, %v756
  %v758 = vpop.f32.mrb[0].mxu0
  %v759 = vpop.f32.mrb[0].mxu0
  %v760 = vadd.f32 %v105, %v759
  %v761 = vpop.f32.mrb[0].mxu0
  %762 = vmatprep.mubr.bf16.mxu0 %v520
  %763 = vmatmul.mubr.bf16.gmra.mrb[0].mxu0 %v345
  %v764 = vpop.f32.mrb[0].mxu0
  %v765 = vadd.f32 %v105, %v764
  %v766 = vpop.f32.mrb[0].mxu0
  %v767 = vpop.f32.mrb[0].mxu0
  %v768 = vadd.f32 %v105, %v767
  %v769 = vpop.f32.mrb[0].mxu0
  %770 = vmatprep.mubr.bf16.mxu0 %v523
  %771 = vmatmul.mubr.bf16.gmra.mrb[0].mxu0 %v347
  %v772 = vpop.f32.mrb[0].mxu0
  %v773 = vadd.f32 %v105, %v772
  %v774 = vpop.f32.mrb[0].mxu0
  %v775 = vpop.f32.mrb[0].mxu0
  %v776 = vadd.f32 %v105, %v775
  %v777 = vpop.f32.mrb[0].mxu0
  %778 = vmatprep.mubr.bf16.mxu0 %v526
  %779 = vmatmul.mubr.bf16.gmra.mrb[0].mxu0 %v349
  %v780 = vpop.f32.mrb[0].mxu0
  %v781 = vadd.f32 %v105, %v780
  %v782 = vpop.f32.mrb[0].mxu0
  %v783 = vpop.f32.mrb[0].mxu0
  %v784 = vadd.f32 %v105, %v783
  %v785 = vpop.f32.mrb[0].mxu0
  %786 = vmatprep.mubr.bf16.mxu0 %v529
  %787 = vmatmul.mubr.bf16.gmra.mrb[0].mxu0 %v351
  %v788 = vpop.f32.mrb[0].mxu0
  %v789 = vadd.f32 %v105, %v788
  %v790 = vpop.f32.mrb[0].mxu0
  %v791 = vpop.f32.mrb[0].mxu0
  %v792 = vadd.f32 %v105, %v791
  %v793 = vpop.f32.mrb[0].mxu0
  %794 = vmatprep.mubr.bf16.mxu0 %v532
  %795 = vmatmul.mubr.bf16.gmra.mrb[0].mxu0 %v353
  %v796 = vpop.f32.mrb[0].mxu0
  %v797 = vadd.f32 %v105, %v796
  %v798 = vpop.f32.mrb[0].mxu0
  %v799 = vpop.f32.mrb[0].mxu0
  %v800 = vadd.f32 %v105, %v799
  %v801 = vpop.f32.mrb[0].mxu0
  %802 = vmatprep.mubr.bf16.mxu0 %v535
  %803 = vmatmul.mubr.bf16.gmra.mrb[0].mxu0 %v355
  %v804 = vpop.f32.mrb[0].mxu0
  %v805 = vadd.f32 %v105, %v804
  %v806 = vpop.f32.mrb[0].mxu0
  %v807 = vpop.f32.mrb[0].mxu0
  %v808 = vadd.f32 %v105, %v807
  %v809 = vpop.f32.mrb[0].mxu0
  %810 = vmatprep.mubr.bf16.mxu0 %v538
  %811 = vmatmul.mubr.bf16.gmra.mrb[0].mxu0 %v357
  %v812 = vpop.f32.mrb[0].mxu0
  %v813 = vadd.f32 %v105, %v812
  %v814 = vpop.f32.mrb[0].mxu0
  %v815 = vpop.f32.mrb[0].mxu0
  %v816 = vadd.f32 %v105, %v815
  %v817 = vpop.f32.mrb[0].mxu0
  %818 = vmatprep.mubr.bf16.mxu0 %v541
  %819 = vmatmul.mubr.bf16.gmra.mrb[0].mxu0 %v359
  %v820 = vpop.f32.mrb[0].mxu0
  %v821 = vadd.f32 %v105, %v820
  %v822 = vpop.f32.mrb[0].mxu0
  %v823 = vpop.f32.mrb[0].mxu0
  %v824 = vadd.f32 %v105, %v823
  %v825 = vpop.f32.mrb[0].mxu0
  %826 = vmatprep.mubr.bf16.mxu0 %v544
  %827 = vmatmul.mubr.bf16.gmra.mrb[0].mxu0 %v361
  %v828 = vpop.f32.mrb[0].mxu0
  %v829 = vadd.f32 %v105, %v828
  %v830 = vpop.f32.mrb[0].mxu0
  %v831 = vpop.f32.mrb[0].mxu0
  %v832 = vadd.f32 %v105, %v831
  %v833 = vpop.f32.mrb[0].mxu0
  %834 = vdwg.mxu0
  %v835 = vmax.f32 %v581, 0.0
  %v836 = vmax.f32 %v584, 0.0
  %v837 = vmax.f32 %v589, 0.0
  %v838 = vmax.f32 %v592, 0.0
  %v839 = vmax.f32 %v597, 0.0
  %v840 = vmax.f32 %v600, 0.0
  %v841 = vmax.f32 %v605, 0.0
  %v842 = vmax.f32 %v608, 0.0
  %v843 = vmax.f32 %v613, 0.0
  %v844 = vmax.f32 %v616, 0.0
  %v845 = vmax.f32 %v621, 0.0
  %v846 = vmax.f32 %v624, 0.0
  %v847 = vmax.f32 %v629, 0.0
  %v848 = vmax.f32 %v632, 0.0
  %v849 = vmax.f32 %v637, 0.0
  %v850 = vmax.f32 %v640, 0.0
  %v851 = vmax.f32 %v645, 0.0
  %v852 = vmax.f32 %v648, 0.0
  %v853 = vmax.f32 %v653, 0.0
  %v854 = vmax.f32 %v656, 0.0
  %v855 = vmax.f32 %v661, 0.0
  %v856 = vmax.f32 %v664, 0.0
  %v857 = vmax.f32 %v669, 0.0
  %v858 = vmax.f32 %v672, 0.0
  %v859 = vmax.f32 %v677, 0.0
  %v860 = vmax.f32 %v680, 0.0
  %v861 = vmax.f32 %v685, 0.0
  %v862 = vmax.f32 %v688, 0.0
  %v863 = vmax.f32 %v693, 0.0
  %v864 = vmax.f32 %v696, 0.0
  %v865 = vmax.f32 %v701, 0.0
  %v866 = vmax.f32 %v704, 0.0
  %v867 = vmax.f32 %v709, 0.0
  %v868 = vmax.f32 %v712, 0.0
  %v869 = vmax.f32 %v717, 0.0
  %v870 = vmax.f32 %v720, 0.0
  %v871 = vmax.f32 %v725, 0.0
  %v872 = vmax.f32 %v728, 0.0
  %v873 = vmax.f32 %v733, 0.0
  %v874 = vmax.f32 %v736, 0.0
  %v875 = vmax.f32 %v741, 0.0
  %v876 = vmax.f32 %v744, 0.0
  %v877 = vmax.f32 %v749, 0.0
  %v878 = vmax.f32 %v752, 0.0
  %v879 = vmax.f32 %v757, 0.0
  %v880 = vmax.f32 %v760, 0.0
  %v881 = vmax.f32 %v765, 0.0
  %v882 = vmax.f32 %v768, 0.0
  %v883 = vmax.f32 %v773, 0.0
  %v884 = vmax.f32 %v776, 0.0
  %v885 = vmax.f32 %v781, 0.0
  %v886 = vmax.f32 %v784, 0.0
  %v887 = vmax.f32 %v789, 0.0
  %v888 = vmax.f32 %v792, 0.0
  %v889 = vmax.f32 %v797, 0.0
  %v890 = vmax.f32 %v800, 0.0
  %v891 = vmax.f32 %v805, 0.0
  %v892 = vmax.f32 %v808, 0.0
  %v893 = vmax.f32 %v813, 0.0
  %v894 = vmax.f32 %v816, 0.0
  %v895 = vmax.f32 %v821, 0.0
  %v896 = vmax.f32 %v824, 0.0
  %v897 = vmax.f32 %v829, 0.0
  %v898 = vmax.f32 %v832, 0.0
  %v899 = vld [vmem:[%s3] sm:$0x1]
  %v901 = vlaneseq
  %v902 = vshrl.u32 %v901, 7
  %v903 = vsub.s32 0, %v902
  %v904 = vrot.slane %v899, %v903
  %v906 = vmul.f32 %v835, %v904
  %v907 = vmul.f32 %v836, %v904
  %v908 = vmul.f32 %v837, %v904
  %v909 = vmul.f32 %v838, %v904
  %v910 = vmul.f32 %v839, %v904
  %v911 = vmul.f32 %v840, %v904
  %v912 = vmul.f32 %v841, %v904
  %v913 = vmul.f32 %v842, %v904
  %v914 = vmul.f32 %v843, %v904
  %v915 = vmul.f32 %v844, %v904
  %v916 = vmul.f32 %v845, %v904
  %v917 = vmul.f32 %v846, %v904
  %v918 = vmul.f32 %v847, %v904
  %v919 = vmul.f32 %v848, %v904
  %v920 = vmul.f32 %v849, %v904
  %v921 = vmul.f32 %v850, %v904
  %v922 = vmul.f32 %v851, %v904
  %v923 = vmul.f32 %v852, %v904
  %v924 = vmul.f32 %v853, %v904
  %v925 = vmul.f32 %v854, %v904
  %v926 = vmul.f32 %v855, %v904
  %v927 = vmul.f32 %v856, %v904
  %v928 = vmul.f32 %v857, %v904
  %v929 = vmul.f32 %v858, %v904
  %v930 = vmul.f32 %v859, %v904
  %v931 = vmul.f32 %v860, %v904
  %v932 = vmul.f32 %v861, %v904
  %v933 = vmul.f32 %v862, %v904
  %v934 = vmul.f32 %v863, %v904
  %v935 = vmul.f32 %v864, %v904
  %v936 = vmul.f32 %v865, %v904
  %v937 = vmul.f32 %v866, %v904
  %v938 = vmul.f32 %v867, %v904
  %v939 = vmul.f32 %v868, %v904
  %v940 = vmul.f32 %v869, %v904
  %v941 = vmul.f32 %v870, %v904
  %v942 = vmul.f32 %v871, %v904
  %v943 = vmul.f32 %v872, %v904
  %v944 = vmul.f32 %v873, %v904
  %v945 = vmul.f32 %v874, %v904
  %v946 = vmul.f32 %v875, %v904
  %v947 = vmul.f32 %v876, %v904
  %v948 = vmul.f32 %v877, %v904
  %v949 = vmul.f32 %v878, %v904
  %v950 = vmul.f32 %v879, %v904
  %v951 = vmul.f32 %v880, %v904
  %v952 = vmul.f32 %v881, %v904
  %v953 = vmul.f32 %v882, %v904
  %v954 = vmul.f32 %v883, %v904
  %v955 = vmul.f32 %v884, %v904
  %v956 = vmul.f32 %v885, %v904
  %v957 = vmul.f32 %v886, %v904
  %v958 = vmul.f32 %v887, %v904
  %v959 = vmul.f32 %v888, %v904
  %v960 = vmul.f32 %v889, %v904
  %v961 = vmul.f32 %v890, %v904
  %v962 = vmul.f32 %v891, %v904
  %v963 = vmul.f32 %v892, %v904
  %v964 = vmul.f32 %v893, %v904
  %v965 = vmul.f32 %v894, %v904
  %v966 = vmul.f32 %v895, %v904
  %v967 = vmul.f32 %v896, %v904
  %v968 = vmul.f32 %v897, %v904
  %v969 = vmul.f32 %v898, %v904
  %v970 = vpack.c.bf16 %v907, %v906
  %v971 = vpack.c.bf16 %v909, %v908
  %v972 = vpack.c.bf16 %v911, %v910
  %v973 = vpack.c.bf16 %v913, %v912
  %v974 = vpack.c.bf16 %v915, %v914
  %v975 = vpack.c.bf16 %v917, %v916
  %v976 = vpack.c.bf16 %v919, %v918
  %v977 = vpack.c.bf16 %v921, %v920
  %v978 = vpack.c.bf16 %v923, %v922
  %v979 = vpack.c.bf16 %v925, %v924
  %v980 = vpack.c.bf16 %v927, %v926
  %v981 = vpack.c.bf16 %v929, %v928
  %v982 = vpack.c.bf16 %v931, %v930
  %v983 = vpack.c.bf16 %v933, %v932
  %v984 = vpack.c.bf16 %v935, %v934
  %v985 = vpack.c.bf16 %v937, %v936
  %v986 = vpack.c.bf16 %v939, %v938
  %v987 = vpack.c.bf16 %v941, %v940
  %v988 = vpack.c.bf16 %v943, %v942
  %v989 = vpack.c.bf16 %v945, %v944
  %v990 = vpack.c.bf16 %v947, %v946
  %v991 = vpack.c.bf16 %v949, %v948
  %v992 = vpack.c.bf16 %v951, %v950
  %v993 = vpack.c.bf16 %v953, %v952
  %v994 = vpack.c.bf16 %v955, %v954
  %v995 = vpack.c.bf16 %v957, %v956
  %v996 = vpack.c.bf16 %v959, %v958
  %v997 = vpack.c.bf16 %v961, %v960
  %v998 = vpack.c.bf16 %v963, %v962
  %v999 = vpack.c.bf16 %v965, %v964
  %v1000 = vpack.c.bf16 %v967, %v966
  %v1001 = vpack.c.bf16 %v969, %v968
  %v1034 = vunpack.c.l.b16 %v970
  %v1035 = vunpack.c.h.b16 %v970
  %v1036 = vunpack.c.l.b16 %v971
  %v1037 = vunpack.c.h.b16 %v971
  %v1038 = vunpack.c.l.b16 %v972
  %v1039 = vunpack.c.h.b16 %v972
  %v1040 = vunpack.c.l.b16 %v973
  %v1041 = vunpack.c.h.b16 %v973
  %v1042 = vunpack.c.l.b16 %v974
  %v1043 = vunpack.c.h.b16 %v974
  %v1044 = vunpack.c.l.b16 %v975
  %v1045 = vunpack.c.h.b16 %v975
  %v1046 = vunpack.c.l.b16 %v976
  %v1047 = vunpack.c.h.b16 %v976
  %v1048 = vunpack.c.l.b16 %v977
  %v1049 = vunpack.c.h.b16 %v977
  %v1050 = vunpack.c.l.b16 %v978
  %v1051 = vunpack.c.h.b16 %v978
  %v1052 = vunpack.c.l.b16 %v979
  %v1053 = vunpack.c.h.b16 %v979
  %v1054 = vunpack.c.l.b16 %v980
  %v1055 = vunpack.c.h.b16 %v980
  %v1056 = vunpack.c.l.b16 %v981
  %v1057 = vunpack.c.h.b16 %v981
  %v1058 = vunpack.c.l.b16 %v982
  %v1059 = vunpack.c.h.b16 %v982
  %v1060 = vunpack.c.l.b16 %v983
  %v1061 = vunpack.c.h.b16 %v983
  %v1062 = vunpack.c.l.b16 %v984
  %v1063 = vunpack.c.h.b16 %v984
  %v1064 = vunpack.c.l.b16 %v985
  %v1065 = vunpack.c.h.b16 %v985
  %v1066 = vunpack.c.l.b16 %v986
  %v1067 = vunpack.c.h.b16 %v986
  %v1068 = vunpack.c.l.b16 %v987
  %v1069 = vunpack.c.h.b16 %v987
  %v1070 = vunpack.c.l.b16 %v988
  %v1071 = vunpack.c.h.b16 %v988
  %v1072 = vunpack.c.l.b16 %v989
  %v1073 = vunpack.c.h.b16 %v989
  %v1074 = vunpack.c.l.b16 %v990
  %v1075 = vunpack.c.h.b16 %v990
  %v1076 = vunpack.c.l.b16 %v991
  %v1077 = vunpack.c.h.b16 %v991
  %v1078 = vunpack.c.l.b16 %v992
  %v1079 = vunpack.c.h.b16 %v992
  %v1080 = vunpack.c.l.b16 %v993
  %v1081 = vunpack.c.h.b16 %v993
  %v1082 = vunpack.c.l.b16 %v994
  %v1083 = vunpack.c.h.b16 %v994
  %v1084 = vunpack.c.l.b16 %v995
  %v1085 = vunpack.c.h.b16 %v995
  %v1086 = vunpack.c.l.b16 %v996
  %v1087 = vunpack.c.h.b16 %v996
  %v1088 = vunpack.c.l.b16 %v997
  %v1089 = vunpack.c.h.b16 %v997
  %v1090 = vunpack.c.l.b16 %v998
  %v1091 = vunpack.c.h.b16 %v998
  %v1092 = vunpack.c.l.b16 %v999
  %v1093 = vunpack.c.h.b16 %v999
  %v1094 = vunpack.c.l.b16 %v1000
  %v1095 = vunpack.c.h.b16 %v1000
  %v1096 = vunpack.c.l.b16 %v1001
  %v1097 = vunpack.c.h.b16 %v1001
  %v1098 = vpack.c.b16 %v1034, %v1034
  %v1099 = vpack.c.b16 %v1035, %v1035
  %v1100 = vpack.c.b16 %v1036, %v1036
  %v1101 = vpack.c.b16 %v1037, %v1037
  %v1102 = vpack.c.b16 %v1038, %v1038
  %v1103 = vpack.c.b16 %v1039, %v1039
  %v1104 = vpack.c.b16 %v1040, %v1040
  %v1105 = vpack.c.b16 %v1041, %v1041
  %v1106 = vpack.c.b16 %v1042, %v1042
  %v1107 = vpack.c.b16 %v1043, %v1043
  %v1108 = vpack.c.b16 %v1044, %v1044
  %v1109 = vpack.c.b16 %v1045, %v1045
  %v1110 = vpack.c.b16 %v1046, %v1046
  %v1111 = vpack.c.b16 %v1047, %v1047
  %v1112 = vpack.c.b16 %v1048, %v1048
  %v1113 = vpack.c.b16 %v1049, %v1049
  %v1114 = vpack.c.b16 %v1050, %v1050
  %v1115 = vpack.c.b16 %v1051, %v1051
  %v1116 = vpack.c.b16 %v1052, %v1052
  %v1117 = vpack.c.b16 %v1053, %v1053
  %v1118 = vpack.c.b16 %v1054, %v1054
  %v1119 = vpack.c.b16 %v1055, %v1055
  %v1120 = vpack.c.b16 %v1056, %v1056
  %v1121 = vpack.c.b16 %v1057, %v1057
  %v1122 = vpack.c.b16 %v1058, %v1058
  %v1123 = vpack.c.b16 %v1059, %v1059
  %v1124 = vpack.c.b16 %v1060, %v1060
  %v1125 = vpack.c.b16 %v1061, %v1061
  %v1126 = vpack.c.b16 %v1062, %v1062
  %v1127 = vpack.c.b16 %v1063, %v1063
  %v1128 = vpack.c.b16 %v1064, %v1064
  %v1129 = vpack.c.b16 %v1065, %v1065
  %v1130 = vpack.c.b16 %v1066, %v1066
  %v1131 = vpack.c.b16 %v1067, %v1067
  %v1132 = vpack.c.b16 %v1068, %v1068
  %v1133 = vpack.c.b16 %v1069, %v1069
  %v1134 = vpack.c.b16 %v1070, %v1070
  %v1135 = vpack.c.b16 %v1071, %v1071
  %v1136 = vpack.c.b16 %v1072, %v1072
  %v1137 = vpack.c.b16 %v1073, %v1073
  %v1138 = vpack.c.b16 %v1074, %v1074
  %v1139 = vpack.c.b16 %v1075, %v1075
  %v1140 = vpack.c.b16 %v1076, %v1076
  %v1141 = vpack.c.b16 %v1077, %v1077
  %v1142 = vpack.c.b16 %v1078, %v1078
  %v1143 = vpack.c.b16 %v1079, %v1079
  %v1144 = vpack.c.b16 %v1080, %v1080
  %v1145 = vpack.c.b16 %v1081, %v1081
  %v1146 = vpack.c.b16 %v1082, %v1082
  %v1147 = vpack.c.b16 %v1083, %v1083
  %v1148 = vpack.c.b16 %v1084, %v1084
  %v1149 = vpack.c.b16 %v1085, %v1085
  %v1150 = vpack.c.b16 %v1086, %v1086
  %v1151 = vpack.c.b16 %v1087, %v1087
  %v1152 = vpack.c.b16 %v1088, %v1088
  %v1153 = vpack.c.b16 %v1089, %v1089
  %v1154 = vpack.c.b16 %v1090, %v1090
  %v1155 = vpack.c.b16 %v1091, %v1091
  %v1156 = vpack.c.b16 %v1092, %v1092
  %v1157 = vpack.c.b16 %v1093, %v1093
  %v1158 = vpack.c.b16 %v1094, %v1094
  %v1159 = vpack.c.b16 %v1095, %v1095
  %v1160 = vpack.c.b16 %v1096, %v1096
  %v1161 = vpack.c.b16 %v1097, %v1097
  %1226 = vst [vmem:[%s4] sm:$0xf] %v1098
  %1227 = vst [vmem:[%s4 + $0x4] sm:$0xf] %v1099
  %1228 = vst [vmem:[%s4 + $0x8] sm:$0xf] %v1100
  %1229 = vst [vmem:[%s4 + $0xc] sm:$0xf] %v1101
  %1230 = vst [vmem:[%s4 + $0x10] sm:$0xf] %v1102
  %1231 = vst [vmem:[%s4 + $0x14] sm:$0xf] %v1103
  %1232 = vst [vmem:[%s4 + $0x18] sm:$0xf] %v1104
  %1233 = vst [vmem:[%s4 + $0x1c] sm:$0xf] %v1105
  %1234 = vst [vmem:[%s4 + $0x20] sm:$0xf] %v1106
  %1235 = vst [vmem:[%s4 + $0x24] sm:$0xf] %v1107
  %1236 = vst [vmem:[%s4 + $0x28] sm:$0xf] %v1108
  %1237 = vst [vmem:[%s4 + $0x2c] sm:$0xf] %v1109
  %1238 = vst [vmem:[%s4 + $0x30] sm:$0xf] %v1110
  %1239 = vst [vmem:[%s4 + $0x34] sm:$0xf] %v1111
  %1240 = vst [vmem:[%s4 + $0x38] sm:$0xf] %v1112
  %1241 = vst [vmem:[%s4 + $0x3c] sm:$0xf] %v1113
  %1242 = vst [vmem:[%s4 + $0x40] sm:$0xf] %v1114
  %1243 = vst [vmem:[%s4 + $0x44] sm:$0xf] %v1115
  %1244 = vst [vmem:[%s4 + $0x48] sm:$0xf] %v1116
  %1245 = vst [vmem:[%s4 + $0x4c] sm:$0xf] %v1117
  %1246 = vst [vmem:[%s4 + $0x50] sm:$0xf] %v1118
  %1247 = vst [vmem:[%s4 + $0x54] sm:$0xf] %v1119
  %1248 = vst [vmem:[%s4 + $0x58] sm:$0xf] %v1120
  %1249 = vst [vmem:[%s4 + $0x5c] sm:$0xf] %v1121
  %1250 = vst [vmem:[%s4 + $0x60] sm:$0xf] %v1122
  %1251 = vst [vmem:[%s4 + $0x64] sm:$0xf] %v1123
  %1252 = vst [vmem:[%s4 + $0x68] sm:$0xf] %v1124
  %1253 = vst [vmem:[%s4 + $0x6c] sm:$0xf] %v1125
  %1254 = vst [vmem:[%s4 + $0x70] sm:$0xf] %v1126
  %1255 = vst [vmem:[%s4 + $0x74] sm:$0xf] %v1127
  %1256 = vst [vmem:[%s4 + $0x78] sm:$0xf] %v1128
  %1257 = vst [vmem:[%s4 + $0x7c] sm:$0xf] %v1129
  %1258 = vst [vmem:[%s4 + $0x80] sm:$0xf] %v1130
  %1259 = vst [vmem:[%s4 + $0x84] sm:$0xf] %v1131
  %1260 = vst [vmem:[%s4 + $0x88] sm:$0xf] %v1132
  %1261 = vst [vmem:[%s4 + $0x8c] sm:$0xf] %v1133
  %1262 = vst [vmem:[%s4 + $0x90] sm:$0xf] %v1134
  %1263 = vst [vmem:[%s4 + $0x94] sm:$0xf] %v1135
  %1264 = vst [vmem:[%s4 + $0x98] sm:$0xf] %v1136
  %1265 = vst [vmem:[%s4 + $0x9c] sm:$0xf] %v1137
  %1266 = vst [vmem:[%s4 + $0xa0] sm:$0xf] %v1138
  %1267 = vst [vmem:[%s4 + $0xa4] sm:$0xf] %v1139
  %1268 = vst [vmem:[%s4 + $0xa8] sm:$0xf] %v1140
  %1269 = vst [vmem:[%s4 + $0xac] sm:$0xf] %v1141
  %1270 = vst [vmem:[%s4 + $0xb0] sm:$0xf] %v1142
  %1271 = vst [vmem:[%s4 + $0xb4] sm:$0xf] %v1143
  %1272 = vst [vmem:[%s4 + $0xb8] sm:$0xf] %v1144
  %1273 = vst [vmem:[%s4 + $0xbc] sm:$0xf] %v1145
  %1274 = vst [vmem:[%s4 + $0xc0] sm:$0xf] %v1146
  %1275 = vst [vmem:[%s4 + $0xc4] sm:$0xf] %v1147
  %1276 = vst [vmem:[%s4 + $0xc8] sm:$0xf] %v1148
  %1277 = vst [vmem:[%s4 + $0xcc] sm:$0xf] %v1149
  %1278 = vst [vmem:[%s4 + $0xd0] sm:$0xf] %v1150
  %1279 = vst [vmem:[%s4 + $0xd4] sm:$0xf] %v1151
  %1280 = vst [vmem:[%s4 + $0xd8] sm:$0xf] %v1152
  %1281 = vst [vmem:[%s4 + $0xdc] sm:$0xf] %v1153
  %1282 = vst [vmem:[%s4 + $0xe0] sm:$0xf] %v1154
  %1283 = vst [vmem:[%s4 + $0xe4] sm:$0xf] %v1155
  %1284 = vst [vmem:[%s4 + $0xe8] sm:$0xf] %v1156
  %1285 = vst [vmem:[%s4 + $0xec] sm:$0xf] %v1157
  %1286 = vst [vmem:[%s4 + $0xf0] sm:$0xf] %v1158
  %1287 = vst [vmem:[%s4 + $0xf4] sm:$0xf] %v1159
  %1288 = vst [vmem:[%s4 + $0xf8] sm:$0xf] %v1160
  %1289 = vst [vmem:[%s4 + $0xfc] sm:$0xf] %v1161
  // Predicated region
  $region18: #{_lambda_.2} parent=0 // pred_check
    _
  $region19: #{_lambda_.2} parent=0 // pred_check_branch
    %1291 = sbr.rel (0) target = $region21
  $region20: #{_lambda_.2} parent=0 // pred_region
    _
  $region21: #{_lambda_.2} parent=0 // pred_fallthru
    _
  // Predicated region
  $region22: #{_lambda_.2} parent=0 // pred_check
    _
  $region23: #{_lambda_.2} parent=0 // pred_check_branch
    %1293 = sbr.rel (0) target = $region25
  $region24: #{_lambda_.2} parent=0 // pred_region
    _
  $region25: #{_lambda_.2} parent=0 // pred_fallthru
    _

// kernel: _lambda_.3
$region0: #{_lambda_.3}
  #allocation0 [shape = 'u32[]', space=smem, size = 0x4, offset = 0x4, fixed_abs, tag = 'smem constant byte address 0x4 - core index']
  #allocation1 [shape = 'u32[144,128]{1,0:T(1,128)}', space=vmem, size = 0x12000, scoped, tag = 'internal scratch']
  %s0 = inlined_call_operand.vmem [shape: bf16[512,144], index: 0, kind: input, shape index: {}]
  %s1 = inlined_call_operand.vmem [shape: bf16[144,128], index: 1, kind: input, shape index: {}]
  %s2 = inlined_call_operand.vmem [shape: f32[1,128], index: 2, kind: input, shape index: {}]
  %s3 = inlined_call_operand.vmem [shape: f32[1,128], index: 3, kind: input, shape index: {}]
  %s4 = inlined_call_operand.vmem [shape: bf16[512,128], index: 4, kind: input, shape index: {}]
  %s5 = inlined_call_operand.vmem [shape: f32[512,128], index: 5, kind: output, shape index: {}]
  %s6 = sld [smem:[#allocation0]]
  $region30: #{_lambda_.3} parent=0
    _
  %s8 = ssub.s32 1, %s6
  %s9 = scalar_select 0, %s8, %s6
  // Predicated region
  $region2: #{_lambda_.3} parent=0 // pred_check
    _
  $region3: #{_lambda_.3} parent=0 // pred_check_branch
    %11 = sbr.rel (0) target = $region5
  $region4: #{_lambda_.3} parent=0 // pred_region
    _
  $region5: #{_lambda_.3} parent=0 // pred_fallthru
    _
  // Predicated region
  $region6: #{_lambda_.3} parent=0 // pred_check
    _
  $region7: #{_lambda_.3} parent=0 // pred_check_branch
    %13 = sbr.rel (0) target = $region9
  $region8: #{_lambda_.3} parent=0 // pred_region
    _
  $region9: #{_lambda_.3} parent=0 // pred_fallthru
    _
  // Predicated region
  $region10: #{_lambda_.3} parent=0 // pred_check
    _
  $region11: #{_lambda_.3} parent=0 // pred_check_branch
    %15 = sbr.rel (0) target = $region13
  $region12: #{_lambda_.3} parent=0 // pred_region
    _
  $region13: #{_lambda_.3} parent=0 // pred_fallthru
    _
  // Predicated region
  $region14: #{_lambda_.3} parent=0 // pred_check
    _
  $region15: #{_lambda_.3} parent=0 // pred_check_branch
    %17 = sbr.rel (0) target = $region17
  $region16: #{_lambda_.3} parent=0 // pred_region
    _
  $region17: #{_lambda_.3} parent=0 // pred_fallthru
    _
  // Predicated region
  $region18: #{_lambda_.3} parent=0 // pred_check
    _
  $region19: #{_lambda_.3} parent=0 // pred_check_branch
    %19 = sbr.rel (0) target = $region21
  $region20: #{_lambda_.3} parent=0 // pred_region
    _
  $region21: #{_lambda_.3} parent=0 // pred_fallthru
    _
  %v21 = vld [vmem:[%s0] sm:$0xff]
  %v22 = vld [vmem:[%s0 + $0x8] sm:$0xff]
  %v23 = vld [vmem:[%s0 + $0x10] sm:$0xff]
  %v24 = vld [vmem:[%s0 + $0x18] sm:$0xff]
  %v25 = vld [vmem:[%s0 + $0x20] sm:$0xff]
  %v26 = vld [vmem:[%s0 + $0x28] sm:$0xff]
  %v27 = vld [vmem:[%s0 + $0x30] sm:$0xff]
  %v28 = vld [vmem:[%s0 + $0x38] sm:$0xff]
  %v29 = vld [vmem:[%s0 + $0x40] sm:$0xff]
  %v30 = vld [vmem:[%s0 + $0x48] sm:$0xff]
  %v31 = vld [vmem:[%s0 + $0x50] sm:$0xff]
  %v32 = vld [vmem:[%s0 + $0x58] sm:$0xff]
  %v33 = vld [vmem:[%s0 + $0x60] sm:$0xff]
  %v34 = vld [vmem:[%s0 + $0x68] sm:$0xff]
  %v35 = vld [vmem:[%s0 + $0x70] sm:$0xff]
  %v36 = vld [vmem:[%s0 + $0x78] sm:$0xff]
  %v37 = vld [vmem:[%s0 + $0x80] sm:$0xff]
  %v38 = vld [vmem:[%s0 + $0x88] sm:$0xff]
  %v39 = vld [vmem:[%s0 + $0x90] sm:$0xff]
  %v40 = vld [vmem:[%s0 + $0x98] sm:$0xff]
  %v41 = vld [vmem:[%s0 + $0xa0] sm:$0xff]
  %v42 = vld [vmem:[%s0 + $0xa8] sm:$0xff]
  %v43 = vld [vmem:[%s0 + $0xb0] sm:$0xff]
  %v44 = vld [vmem:[%s0 + $0xb8] sm:$0xff]
  %v45 = vld [vmem:[%s0 + $0xc0] sm:$0xff]
  %v46 = vld [vmem:[%s0 + $0xc8] sm:$0xff]
  %v47 = vld [vmem:[%s0 + $0xd0] sm:$0xff]
  %v48 = vld [vmem:[%s0 + $0xd8] sm:$0xff]
  %v49 = vld [vmem:[%s0 + $0xe0] sm:$0xff]
  %v50 = vld [vmem:[%s0 + $0xe8] sm:$0xff]
  %v51 = vld [vmem:[%s0 + $0xf0] sm:$0xff]
  %v52 = vld [vmem:[%s0 + $0xf8] sm:$0xff]
  %v53 = vld [vmem:[%s0 + $0x100] sm:$0xff]
  %v54 = vld [vmem:[%s0 + $0x108] sm:$0xff]
  %v55 = vld [vmem:[%s0 + $0x110] sm:$0xff]
  %v56 = vld [vmem:[%s0 + $0x118] sm:$0xff]
  %v57 = vld [vmem:[%s0 + $0x120] sm:$0xff]
  %v58 = vld [vmem:[%s0 + $0x128] sm:$0xff]
  %v59 = vld [vmem:[%s0 + $0x130] sm:$0xff]
  %v60 = vld [vmem:[%s0 + $0x138] sm:$0xff]
  %v61 = vld [vmem:[%s0 + $0x140] sm:$0xff]
  %v62 = vld [vmem:[%s0 + $0x148] sm:$0xff]
  %v63 = vld [vmem:[%s0 + $0x150] sm:$0xff]
  %v64 = vld [vmem:[%s0 + $0x158] sm:$0xff]
  %v65 = vld [vmem:[%s0 + $0x160] sm:$0xff]
  %v66 = vld [vmem:[%s0 + $0x168] sm:$0xff]
  %v67 = vld [vmem:[%s0 + $0x170] sm:$0xff]
  %v68 = vld [vmem:[%s0 + $0x178] sm:$0xff]
  %v69 = vld [vmem:[%s0 + $0x180] sm:$0xff]
  %v70 = vld [vmem:[%s0 + $0x188] sm:$0xff]
  %v71 = vld [vmem:[%s0 + $0x190] sm:$0xff]
  %v72 = vld [vmem:[%s0 + $0x198] sm:$0xff]
  %v73 = vld [vmem:[%s0 + $0x1a0] sm:$0xff]
  %v74 = vld [vmem:[%s0 + $0x1a8] sm:$0xff]
  %v75 = vld [vmem:[%s0 + $0x1b0] sm:$0xff]
  %v76 = vld [vmem:[%s0 + $0x1b8] sm:$0xff]
  %v77 = vld [vmem:[%s0 + $0x1c0] sm:$0xff]
  %v78 = vld [vmem:[%s0 + $0x1c8] sm:$0xff]
  %v79 = vld [vmem:[%s0 + $0x1d0] sm:$0xff]
  %v80 = vld [vmem:[%s0 + $0x1d8] sm:$0xff]
  %v81 = vld [vmem:[%s0 + $0x1e0] sm:$0xff]
  %v82 = vld [vmem:[%s0 + $0x1e8] sm:$0xff]
  %v83 = vld [vmem:[%s0 + $0x1f0] sm:$0xff]
  %v84 = vld [vmem:[%s0 + $0x1f8] sm:$0xff]
  %v85 = vld [vmem:[%s1] sm:$0xf]
  %v86 = vld [vmem:[%s1 + $0x4] sm:$0xf]
  %v87 = vld [vmem:[%s1 + $0x8] sm:$0xf]
  %v88 = vld [vmem:[%s1 + $0xc] sm:$0xf]
  %v89 = vld [vmem:[%s1 + $0x10] sm:$0xf]
  %v90 = vld [vmem:[%s1 + $0x14] sm:$0xf]
  %v91 = vld [vmem:[%s1 + $0x18] sm:$0xf]
  %v92 = vld [vmem:[%s1 + $0x1c] sm:$0xf]
  %v93 = vld [vmem:[%s1 + $0x20] sm:$0xf]
  %v94 = vld [vmem:[%s1 + $0x24] sm:$0xf]
  %v95 = vld [vmem:[%s1 + $0x28] sm:$0xf]
  %v96 = vld [vmem:[%s1 + $0x2c] sm:$0xf]
  %v97 = vld [vmem:[%s1 + $0x30] sm:$0xf]
  %v98 = vld [vmem:[%s1 + $0x34] sm:$0xf]
  %v99 = vld [vmem:[%s1 + $0x38] sm:$0xf]
  %v100 = vld [vmem:[%s1 + $0x3c] sm:$0xf]
  %v101 = vld [vmem:[%s1 + $0x40] sm:$0xf]
  %v102 = vld [vmem:[%s1 + $0x44] sm:$0xf]
  %v103 = vld [vmem:[%s2] sm:$0x1]
  %v105 = vlaneseq
  %v106 = vshrl.u32 %v105, 7
  %v107 = vsub.s32 0, %v106
  %v108 = vrot.slane %v103, %v107
  %v174 = vunpack.c.l.b16 %v21
  %v175 = vunpack.c.h.b16 %v21
  %v176 = vunpack.c.l.b16 %v22
  %v177 = vunpack.c.h.b16 %v22
  %v178 = vunpack.c.l.b16 %v23
  %v179 = vunpack.c.h.b16 %v23
  %v180 = vunpack.c.l.b16 %v24
  %v181 = vunpack.c.h.b16 %v24
  %v182 = vunpack.c.l.b16 %v25
  %v183 = vunpack.c.h.b16 %v25
  %v184 = vunpack.c.l.b16 %v26
  %v185 = vunpack.c.h.b16 %v26
  %v186 = vunpack.c.l.b16 %v27
  %v187 = vunpack.c.h.b16 %v27
  %v188 = vunpack.c.l.b16 %v28
  %v189 = vunpack.c.h.b16 %v28
  %v190 = vunpack.c.l.b16 %v29
  %v191 = vunpack.c.h.b16 %v29
  %v192 = vunpack.c.l.b16 %v30
  %v193 = vunpack.c.h.b16 %v30
  %v194 = vunpack.c.l.b16 %v31
  %v195 = vunpack.c.h.b16 %v31
  %v196 = vunpack.c.l.b16 %v32
  %v197 = vunpack.c.h.b16 %v32
  %v198 = vunpack.c.l.b16 %v33
  %v199 = vunpack.c.h.b16 %v33
  %v200 = vunpack.c.l.b16 %v34
  %v201 = vunpack.c.h.b16 %v34
  %v202 = vunpack.c.l.b16 %v35
  %v203 = vunpack.c.h.b16 %v35
  %v204 = vunpack.c.l.b16 %v36
  %v205 = vunpack.c.h.b16 %v36
  %v206 = vunpack.c.l.b16 %v37
  %v207 = vunpack.c.h.b16 %v37
  %v208 = vunpack.c.l.b16 %v38
  %v209 = vunpack.c.h.b16 %v38
  %v210 = vunpack.c.l.b16 %v39
  %v211 = vunpack.c.h.b16 %v39
  %v212 = vunpack.c.l.b16 %v40
  %v213 = vunpack.c.h.b16 %v40
  %v214 = vunpack.c.l.b16 %v41
  %v215 = vunpack.c.h.b16 %v41
  %v216 = vunpack.c.l.b16 %v42
  %v217 = vunpack.c.h.b16 %v42
  %v218 = vunpack.c.l.b16 %v43
  %v219 = vunpack.c.h.b16 %v43
  %v220 = vunpack.c.l.b16 %v44
  %v221 = vunpack.c.h.b16 %v44
  %v222 = vunpack.c.l.b16 %v45
  %v223 = vunpack.c.h.b16 %v45
  %v224 = vunpack.c.l.b16 %v46
  %v225 = vunpack.c.h.b16 %v46
  %v226 = vunpack.c.l.b16 %v47
  %v227 = vunpack.c.h.b16 %v47
  %v228 = vunpack.c.l.b16 %v48
  %v229 = vunpack.c.h.b16 %v48
  %v230 = vunpack.c.l.b16 %v49
  %v231 = vunpack.c.h.b16 %v49
  %v232 = vunpack.c.l.b16 %v50
  %v233 = vunpack.c.h.b16 %v50
  %v234 = vunpack.c.l.b16 %v51
  %v235 = vunpack.c.h.b16 %v51
  %v236 = vunpack.c.l.b16 %v52
  %v237 = vunpack.c.h.b16 %v52
  %v238 = vunpack.c.l.b16 %v53
  %v239 = vunpack.c.h.b16 %v53
  %v240 = vunpack.c.l.b16 %v54
  %v241 = vunpack.c.h.b16 %v54
  %v242 = vunpack.c.l.b16 %v55
  %v243 = vunpack.c.h.b16 %v55
  %v244 = vunpack.c.l.b16 %v56
  %v245 = vunpack.c.h.b16 %v56
  %v246 = vunpack.c.l.b16 %v57
  %v247 = vunpack.c.h.b16 %v57
  %v248 = vunpack.c.l.b16 %v58
  %v249 = vunpack.c.h.b16 %v58
  %v250 = vunpack.c.l.b16 %v59
  %v251 = vunpack.c.h.b16 %v59
  %v252 = vunpack.c.l.b16 %v60
  %v253 = vunpack.c.h.b16 %v60
  %v254 = vunpack.c.l.b16 %v61
  %v255 = vunpack.c.h.b16 %v61
  %v256 = vunpack.c.l.b16 %v62
  %v257 = vunpack.c.h.b16 %v62
  %v258 = vunpack.c.l.b16 %v63
  %v259 = vunpack.c.h.b16 %v63
  %v260 = vunpack.c.l.b16 %v64
  %v261 = vunpack.c.h.b16 %v64
  %v262 = vunpack.c.l.b16 %v65
  %v263 = vunpack.c.h.b16 %v65
  %v264 = vunpack.c.l.b16 %v66
  %v265 = vunpack.c.h.b16 %v66
  %v266 = vunpack.c.l.b16 %v67
  %v267 = vunpack.c.h.b16 %v67
  %v268 = vunpack.c.l.b16 %v68
  %v269 = vunpack.c.h.b16 %v68
  %v270 = vunpack.c.l.b16 %v69
  %v271 = vunpack.c.h.b16 %v69
  %v272 = vunpack.c.l.b16 %v70
  %v273 = vunpack.c.h.b16 %v70
  %v274 = vunpack.c.l.b16 %v71
  %v275 = vunpack.c.h.b16 %v71
  %v276 = vunpack.c.l.b16 %v72
  %v277 = vunpack.c.h.b16 %v72
  %v278 = vunpack.c.l.b16 %v73
  %v279 = vunpack.c.h.b16 %v73
  %v280 = vunpack.c.l.b16 %v74
  %v281 = vunpack.c.h.b16 %v74
  %v282 = vunpack.c.l.b16 %v75
  %v283 = vunpack.c.h.b16 %v75
  %v284 = vunpack.c.l.b16 %v76
  %v285 = vunpack.c.h.b16 %v76
  %v286 = vunpack.c.l.b16 %v77
  %v287 = vunpack.c.h.b16 %v77
  %v288 = vunpack.c.l.b16 %v78
  %v289 = vunpack.c.h.b16 %v78
  %v290 = vunpack.c.l.b16 %v79
  %v291 = vunpack.c.h.b16 %v79
  %v292 = vunpack.c.l.b16 %v80
  %v293 = vunpack.c.h.b16 %v80
  %v294 = vunpack.c.l.b16 %v81
  %v295 = vunpack.c.h.b16 %v81
  %v296 = vunpack.c.l.b16 %v82
  %v297 = vunpack.c.h.b16 %v82
  %v298 = vunpack.c.l.b16 %v83
  %v299 = vunpack.c.h.b16 %v83
  %v300 = vunpack.c.l.b16 %v84
  %v301 = vunpack.c.h.b16 %v84
  %v302 = vpack.c.b16 %v176, %v174
  %v303 = vpack.c.b16 %v177, %v175
  %v304 = vpack.c.b16 %v180, %v178
  %v305 = vpack.c.b16 %v181, %v179
  %v306 = vpack.c.b16 %v184, %v182
  %v307 = vpack.c.b16 %v185, %v183
  %v308 = vpack.c.b16 %v188, %v186
  %v309 = vpack.c.b16 %v189, %v187
  %v310 = vpack.c.b16 %v192, %v190
  %v311 = vpack.c.b16 %v193, %v191
  %v312 = vpack.c.b16 %v196, %v194
  %v313 = vpack.c.b16 %v197, %v195
  %v314 = vpack.c.b16 %v200, %v198
  %v315 = vpack.c.b16 %v201, %v199
  %v316 = vpack.c.b16 %v204, %v202
  %v317 = vpack.c.b16 %v205, %v203
  %v318 = vpack.c.b16 %v208, %v206
  %v319 = vpack.c.b16 %v209, %v207
  %v320 = vpack.c.b16 %v212, %v210
  %v321 = vpack.c.b16 %v213, %v211
  %v322 = vpack.c.b16 %v216, %v214
  %v323 = vpack.c.b16 %v217, %v215
  %v324 = vpack.c.b16 %v220, %v218
  %v325 = vpack.c.b16 %v221, %v219
  %v326 = vpack.c.b16 %v224, %v222
  %v327 = vpack.c.b16 %v225, %v223
  %v328 = vpack.c.b16 %v228, %v226
  %v329 = vpack.c.b16 %v229, %v227
  %v330 = vpack.c.b16 %v232, %v230
  %v331 = vpack.c.b16 %v233, %v231
  %v332 = vpack.c.b16 %v236, %v234
  %v333 = vpack.c.b16 %v237, %v235
  %v334 = vpack.c.b16 %v240, %v238
  %v335 = vpack.c.b16 %v241, %v239
  %v336 = vpack.c.b16 %v244, %v242
  %v337 = vpack.c.b16 %v245, %v243
  %v338 = vpack.c.b16 %v248, %v246
  %v339 = vpack.c.b16 %v249, %v247
  %v340 = vpack.c.b16 %v252, %v250
  %v341 = vpack.c.b16 %v253, %v251
  %v342 = vpack.c.b16 %v256, %v254
  %v343 = vpack.c.b16 %v257, %v255
  %v344 = vpack.c.b16 %v260, %v258
  %v345 = vpack.c.b16 %v261, %v259
  %v346 = vpack.c.b16 %v264, %v262
  %v347 = vpack.c.b16 %v265, %v263
  %v348 = vpack.c.b16 %v268, %v266
  %v349 = vpack.c.b16 %v269, %v267
  %v350 = vpack.c.b16 %v272, %v270
  %v351 = vpack.c.b16 %v273, %v271
  %v352 = vpack.c.b16 %v276, %v274
  %v353 = vpack.c.b16 %v277, %v275
  %v354 = vpack.c.b16 %v280, %v278
  %v355 = vpack.c.b16 %v281, %v279
  %v356 = vpack.c.b16 %v284, %v282
  %v357 = vpack.c.b16 %v285, %v283
  %v358 = vpack.c.b16 %v288, %v286
  %v359 = vpack.c.b16 %v289, %v287
  %v360 = vpack.c.b16 %v292, %v290
  %v361 = vpack.c.b16 %v293, %v291
  %v362 = vpack.c.b16 %v296, %v294
  %v363 = vpack.c.b16 %v297, %v295
  %v364 = vpack.c.b16 %v300, %v298
  %v365 = vpack.c.b16 %v301, %v299
  %v416 = vunpack.c.l.b16 %v85
  %v417 = vunpack.c.l.b16 %v86
  %v418 = vunpack.c.l.b16 %v87
  %v419 = vunpack.c.l.b16 %v88
  %v420 = vunpack.c.l.b16 %v89
  %v421 = vunpack.c.l.b16 %v90
  %v422 = vunpack.c.l.b16 %v91
  %v423 = vunpack.c.l.b16 %v92
  %v424 = vunpack.c.l.b16 %v93
  %v425 = vunpack.c.l.b16 %v94
  %v426 = vunpack.c.l.b16 %v95
  %v427 = vunpack.c.l.b16 %v96
  %v428 = vunpack.c.l.b16 %v97
  %v429 = vunpack.c.l.b16 %v98
  %v430 = vunpack.c.l.b16 %v99
  %v431 = vunpack.c.l.b16 %v100
  %v432 = vunpack.c.l.b16 %v101
  %v433 = vunpack.c.l.b16 %v102
  %v434 = vpack.c.b16 %v417, %v416
  %v435 = vpack.c.b16 %v419, %v418
  %v436 = vpack.c.b16 %v421, %v420
  %v437 = vpack.c.b16 %v423, %v422
  %v438 = vpack.c.b16 %v425, %v424
  %v439 = vpack.c.b16 %v427, %v426
  %v440 = vpack.c.b16 %v429, %v428
  %v441 = vpack.c.b16 %v431, %v430
  %v442 = vpack.c.b16 %v433, %v432
  %vm452 = vcmask 130048
  %v454 = vsel %vm452, %v303, 0
  %v457 = vsel %vm452, %v305, 0
  %v460 = vsel %vm452, %v307, 0
  %v463 = vsel %vm452, %v309, 0
  %v466 = vsel %vm452, %v311, 0
  %v469 = vsel %vm452, %v313, 0
  %v472 = vsel %vm452, %v315, 0
  %v475 = vsel %vm452, %v317, 0
  %v478 = vsel %vm452, %v319, 0
  %v481 = vsel %vm452, %v321, 0
  %v484 = vsel %vm452, %v323, 0
  %v487 = vsel %vm452, %v325, 0
  %v490 = vsel %vm452, %v327, 0
  %v493 = vsel %vm452, %v329, 0
  %v496 = vsel %vm452, %v331, 0
  %v499 = vsel %vm452, %v333, 0
  %v502 = vsel %vm452, %v335, 0
  %v505 = vsel %vm452, %v337, 0
  %v508 = vsel %vm452, %v339, 0
  %v511 = vsel %vm452, %v341, 0
  %v514 = vsel %vm452, %v343, 0
  %v517 = vsel %vm452, %v345, 0
  %v520 = vsel %vm452, %v347, 0
  %v523 = vsel %vm452, %v349, 0
  %v526 = vsel %vm452, %v351, 0
  %v529 = vsel %vm452, %v353, 0
  %v532 = vsel %vm452, %v355, 0
  %v535 = vsel %vm452, %v357, 0
  %v538 = vsel %vm452, %v359, 0
  %v541 = vsel %vm452, %v361, 0
  %v544 = vsel %vm452, %v363, 0
  %v547 = vsel %vm452, %v365, 0
  %549 = vmatprep.subr.bf16.mxu0 0
  %550 = vmatpush1.bf16.msra.mxu0 %v434
  %551 = vmatprep.subr.bf16.mxu0 0
  %552 = vmatpush1.bf16.msra.mxu0 %v435
  %553 = vmatprep.subr.bf16.mxu0 0
  %554 = vmatpush1.bf16.msra.mxu0 %v436
  %555 = vmatprep.subr.bf16.mxu0 0
  %556 = vmatpush1.bf16.msra.mxu0 %v437
  %557 = vmatprep.subr.bf16.mxu0 0
  %558 = vmatpush1.bf16.msra.mxu0 %v438
  %559 = vmatprep.subr.bf16.mxu0 0
  %560 = vmatpush1.bf16.msra.mxu0 %v439
  %561 = vmatprep.subr.bf16.mxu0 0
  %562 = vmatpush1.bf16.msra.mxu0 %v440
  %563 = vmatprep.subr.bf16.mxu0 0
  %564 = vmatpush1.bf16.msra.mxu0 %v441
  %565 = vmatprep.subr.bf16.mxu0 0
  %566 = vmatpush1.bf16.msra.mxu0 %v442
  %567 = vmatprep.subr.bf16.mxu0 0
  %568 = vmatpush1.bf16.msra.mxu0 0
  %569 = vmatprep.subr.bf16.mxu0 0
  %570 = vmatpush1.bf16.msra.mxu0 0
  %571 = vmatprep.subr.bf16.mxu0 0
  %572 = vmatpush1.bf16.msra.mxu0 0
  %573 = vmatprep.subr.bf16.mxu0 0
  %574 = vmatpush1.bf16.msra.mxu0 0
  %575 = vmatprep.subr.bf16.mxu0 0
  %576 = vmatpush1.bf16.msra.mxu0 0
  %577 = vmatprep.subr.bf16.mxu0 0
  %578 = vmatpush1.bf16.msra.mxu0 0
  %579 = vmatprep.subr.bf16.mxu0 0
  %580 = vmatpush1.bf16.msra.mxu0 0
  %581 = vmatprep.mubr.bf16.mxu0 %v454
  %582 = vmatmul.mubr.bf16.gmra.mrb[0].mxu0 %v302
  %v583 = vpop.f32.mrb[0].mxu0
  %v584 = vadd.f32 %v108, %v583
  %v585 = vpop.f32.mrb[0].mxu0
  %v586 = vpop.f32.mrb[0].mxu0
  %v587 = vadd.f32 %v108, %v586
  %v588 = vpop.f32.mrb[0].mxu0
  %589 = vmatprep.mubr.bf16.mxu0 %v457
  %590 = vmatmul.mubr.bf16.gmra.mrb[0].mxu0 %v304
  %v591 = vpop.f32.mrb[0].mxu0
  %v592 = vadd.f32 %v108, %v591
  %v593 = vpop.f32.mrb[0].mxu0
  %v594 = vpop.f32.mrb[0].mxu0
  %v595 = vadd.f32 %v108, %v594
  %v596 = vpop.f32.mrb[0].mxu0
  %597 = vmatprep.mubr.bf16.mxu0 %v460
  %598 = vmatmul.mubr.bf16.gmra.mrb[0].mxu0 %v306
  %v599 = vpop.f32.mrb[0].mxu0
  %v600 = vadd.f32 %v108, %v599
  %v601 = vpop.f32.mrb[0].mxu0
  %v602 = vpop.f32.mrb[0].mxu0
  %v603 = vadd.f32 %v108, %v602
  %v604 = vpop.f32.mrb[0].mxu0
  %605 = vmatprep.mubr.bf16.mxu0 %v463
  %606 = vmatmul.mubr.bf16.gmra.mrb[0].mxu0 %v308
  %v607 = vpop.f32.mrb[0].mxu0
  %v608 = vadd.f32 %v108, %v607
  %v609 = vpop.f32.mrb[0].mxu0
  %v610 = vpop.f32.mrb[0].mxu0
  %v611 = vadd.f32 %v108, %v610
  %v612 = vpop.f32.mrb[0].mxu0
  %613 = vmatprep.mubr.bf16.mxu0 %v466
  %614 = vmatmul.mubr.bf16.gmra.mrb[0].mxu0 %v310
  %v615 = vpop.f32.mrb[0].mxu0
  %v616 = vadd.f32 %v108, %v615
  %v617 = vpop.f32.mrb[0].mxu0
  %v618 = vpop.f32.mrb[0].mxu0
  %v619 = vadd.f32 %v108, %v618
  %v620 = vpop.f32.mrb[0].mxu0
  %621 = vmatprep.mubr.bf16.mxu0 %v469
  %622 = vmatmul.mubr.bf16.gmra.mrb[0].mxu0 %v312
  %v623 = vpop.f32.mrb[0].mxu0
  %v624 = vadd.f32 %v108, %v623
  %v625 = vpop.f32.mrb[0].mxu0
  %v626 = vpop.f32.mrb[0].mxu0
  %v627 = vadd.f32 %v108, %v626
  %v628 = vpop.f32.mrb[0].mxu0
  %629 = vmatprep.mubr.bf16.mxu0 %v472
  %630 = vmatmul.mubr.bf16.gmra.mrb[0].mxu0 %v314
  %v631 = vpop.f32.mrb[0].mxu0
  %v632 = vadd.f32 %v108, %v631
  %v633 = vpop.f32.mrb[0].mxu0
  %v634 = vpop.f32.mrb[0].mxu0
  %v635 = vadd.f32 %v108, %v634
  %v636 = vpop.f32.mrb[0].mxu0
  %637 = vmatprep.mubr.bf16.mxu0 %v475
  %638 = vmatmul.mubr.bf16.gmra.mrb[0].mxu0 %v316
  %v639 = vpop.f32.mrb[0].mxu0
  %v640 = vadd.f32 %v108, %v639
  %v641 = vpop.f32.mrb[0].mxu0
  %v642 = vpop.f32.mrb[0].mxu0
  %v643 = vadd.f32 %v108, %v642
  %v644 = vpop.f32.mrb[0].mxu0
  %645 = vmatprep.mubr.bf16.mxu0 %v478
  %646 = vmatmul.mubr.bf16.gmra.mrb[0].mxu0 %v318
  %v647 = vpop.f32.mrb[0].mxu0
  %v648 = vadd.f32 %v108, %v647
  %v649 = vpop.f32.mrb[0].mxu0
  %v650 = vpop.f32.mrb[0].mxu0
  %v651 = vadd.f32 %v108, %v650
  %v652 = vpop.f32.mrb[0].mxu0
  %653 = vmatprep.mubr.bf16.mxu0 %v481
  %654 = vmatmul.mubr.bf16.gmra.mrb[0].mxu0 %v320
  %v655 = vpop.f32.mrb[0].mxu0
  %v656 = vadd.f32 %v108, %v655
  %v657 = vpop.f32.mrb[0].mxu0
  %v658 = vpop.f32.mrb[0].mxu0
  %v659 = vadd.f32 %v108, %v658
  %v660 = vpop.f32.mrb[0].mxu0
  %661 = vmatprep.mubr.bf16.mxu0 %v484
  %662 = vmatmul.mubr.bf16.gmra.mrb[0].mxu0 %v322
  %v663 = vpop.f32.mrb[0].mxu0
  %v664 = vadd.f32 %v108, %v663
  %v665 = vpop.f32.mrb[0].mxu0
  %v666 = vpop.f32.mrb[0].mxu0
  %v667 = vadd.f32 %v108, %v666
  %v668 = vpop.f32.mrb[0].mxu0
  %669 = vmatprep.mubr.bf16.mxu0 %v487
  %670 = vmatmul.mubr.bf16.gmra.mrb[0].mxu0 %v324
  %v671 = vpop.f32.mrb[0].mxu0
  %v672 = vadd.f32 %v108, %v671
  %v673 = vpop.f32.mrb[0].mxu0
  %v674 = vpop.f32.mrb[0].mxu0
  %v675 = vadd.f32 %v108, %v674
  %v676 = vpop.f32.mrb[0].mxu0
  %677 = vmatprep.mubr.bf16.mxu0 %v490
  %678 = vmatmul.mubr.bf16.gmra.mrb[0].mxu0 %v326
  %v679 = vpop.f32.mrb[0].mxu0
  %v680 = vadd.f32 %v108, %v679
  %v681 = vpop.f32.mrb[0].mxu0
  %v682 = vpop.f32.mrb[0].mxu0
  %v683 = vadd.f32 %v108, %v682
  %v684 = vpop.f32.mrb[0].mxu0
  %685 = vmatprep.mubr.bf16.mxu0 %v493
  %686 = vmatmul.mubr.bf16.gmra.mrb[0].mxu0 %v328
  %v687 = vpop.f32.mrb[0].mxu0
  %v688 = vadd.f32 %v108, %v687
  %v689 = vpop.f32.mrb[0].mxu0
  %v690 = vpop.f32.mrb[0].mxu0
  %v691 = vadd.f32 %v108, %v690
  %v692 = vpop.f32.mrb[0].mxu0
  %693 = vmatprep.mubr.bf16.mxu0 %v496
  %694 = vmatmul.mubr.bf16.gmra.mrb[0].mxu0 %v330
  %v695 = vpop.f32.mrb[0].mxu0
  %v696 = vadd.f32 %v108, %v695
  %v697 = vpop.f32.mrb[0].mxu0
  %v698 = vpop.f32.mrb[0].mxu0
  %v699 = vadd.f32 %v108, %v698
  %v700 = vpop.f32.mrb[0].mxu0
  %701 = vmatprep.mubr.bf16.mxu0 %v499
  %702 = vmatmul.mubr.bf16.gmra.mrb[0].mxu0 %v332
  %v703 = vpop.f32.mrb[0].mxu0
  %v704 = vadd.f32 %v108, %v703
  %v705 = vpop.f32.mrb[0].mxu0
  %v706 = vpop.f32.mrb[0].mxu0
  %v707 = vadd.f32 %v108, %v706
  %v708 = vpop.f32.mrb[0].mxu0
  %709 = vmatprep.mubr.bf16.mxu0 %v502
  %710 = vmatmul.mubr.bf16.gmra.mrb[0].mxu0 %v334
  %v711 = vpop.f32.mrb[0].mxu0
  %v712 = vadd.f32 %v108, %v711
  %v713 = vpop.f32.mrb[0].mxu0
  %v714 = vpop.f32.mrb[0].mxu0
  %v715 = vadd.f32 %v108, %v714
  %v716 = vpop.f32.mrb[0].mxu0
  %717 = vmatprep.mubr.bf16.mxu0 %v505
  %718 = vmatmul.mubr.bf16.gmra.mrb[0].mxu0 %v336
  %v719 = vpop.f32.mrb[0].mxu0
  %v720 = vadd.f32 %v108, %v719
  %v721 = vpop.f32.mrb[0].mxu0
  %v722 = vpop.f32.mrb[0].mxu0
  %v723 = vadd.f32 %v108, %v722
  %v724 = vpop.f32.mrb[0].mxu0
  %725 = vmatprep.mubr.bf16.mxu0 %v508
  %726 = vmatmul.mubr.bf16.gmra.mrb[0].mxu0 %v338
  %v727 = vpop.f32.mrb[0].mxu0
  %v728 = vadd.f32 %v108, %v727
  %v729 = vpop.f32.mrb[0].mxu0
  %v730 = vpop.f32.mrb[0].mxu0
  %v731 = vadd.f32 %v108, %v730
  %v732 = vpop.f32.mrb[0].mxu0
  %733 = vmatprep.mubr.bf16.mxu0 %v511
  %734 = vmatmul.mubr.bf16.gmra.mrb[0].mxu0 %v340
  %v735 = vpop.f32.mrb[0].mxu0
  %v736 = vadd.f32 %v108, %v735
  %v737 = vpop.f32.mrb[0].mxu0
  %v738 = vpop.f32.mrb[0].mxu0
  %v739 = vadd.f32 %v108, %v738
  %v740 = vpop.f32.mrb[0].mxu0
  %741 = vmatprep.mubr.bf16.mxu0 %v514
  %742 = vmatmul.mubr.bf16.gmra.mrb[0].mxu0 %v342
  %v743 = vpop.f32.mrb[0].mxu0
  %v744 = vadd.f32 %v108, %v743
  %v745 = vpop.f32.mrb[0].mxu0
  %v746 = vpop.f32.mrb[0].mxu0
  %v747 = vadd.f32 %v108, %v746
  %v748 = vpop.f32.mrb[0].mxu0
  %749 = vmatprep.mubr.bf16.mxu0 %v517
  %750 = vmatmul.mubr.bf16.gmra.mrb[0].mxu0 %v344
  %v751 = vpop.f32.mrb[0].mxu0
  %v752 = vadd.f32 %v108, %v751
  %v753 = vpop.f32.mrb[0].mxu0
  %v754 = vpop.f32.mrb[0].mxu0
  %v755 = vadd.f32 %v108, %v754
  %v756 = vpop.f32.mrb[0].mxu0
  %757 = vmatprep.mubr.bf16.mxu0 %v520
  %758 = vmatmul.mubr.bf16.gmra.mrb[0].mxu0 %v346
  %v759 = vpop.f32.mrb[0].mxu0
  %v760 = vadd.f32 %v108, %v759
  %v761 = vpop.f32.mrb[0].mxu0
  %v762 = vpop.f32.mrb[0].mxu0
  %v763 = vadd.f32 %v108, %v762
  %v764 = vpop.f32.mrb[0].mxu0
  %765 = vmatprep.mubr.bf16.mxu0 %v523
  %766 = vmatmul.mubr.bf16.gmra.mrb[0].mxu0 %v348
  %v767 = vpop.f32.mrb[0].mxu0
  %v768 = vadd.f32 %v108, %v767
  %v769 = vpop.f32.mrb[0].mxu0
  %v770 = vpop.f32.mrb[0].mxu0
  %v771 = vadd.f32 %v108, %v770
  %v772 = vpop.f32.mrb[0].mxu0
  %773 = vmatprep.mubr.bf16.mxu0 %v526
  %774 = vmatmul.mubr.bf16.gmra.mrb[0].mxu0 %v350
  %v775 = vpop.f32.mrb[0].mxu0
  %v776 = vadd.f32 %v108, %v775
  %v777 = vpop.f32.mrb[0].mxu0
  %v778 = vpop.f32.mrb[0].mxu0
  %v779 = vadd.f32 %v108, %v778
  %v780 = vpop.f32.mrb[0].mxu0
  %781 = vmatprep.mubr.bf16.mxu0 %v529
  %782 = vmatmul.mubr.bf16.gmra.mrb[0].mxu0 %v352
  %v783 = vpop.f32.mrb[0].mxu0
  %v784 = vadd.f32 %v108, %v783
  %v785 = vpop.f32.mrb[0].mxu0
  %v786 = vpop.f32.mrb[0].mxu0
  %v787 = vadd.f32 %v108, %v786
  %v788 = vpop.f32.mrb[0].mxu0
  %789 = vmatprep.mubr.bf16.mxu0 %v532
  %790 = vmatmul.mubr.bf16.gmra.mrb[0].mxu0 %v354
  %v791 = vpop.f32.mrb[0].mxu0
  %v792 = vadd.f32 %v108, %v791
  %v793 = vpop.f32.mrb[0].mxu0
  %v794 = vpop.f32.mrb[0].mxu0
  %v795 = vadd.f32 %v108, %v794
  %v796 = vpop.f32.mrb[0].mxu0
  %797 = vmatprep.mubr.bf16.mxu0 %v535
  %798 = vmatmul.mubr.bf16.gmra.mrb[0].mxu0 %v356
  %v799 = vpop.f32.mrb[0].mxu0
  %v800 = vadd.f32 %v108, %v799
  %v801 = vpop.f32.mrb[0].mxu0
  %v802 = vpop.f32.mrb[0].mxu0
  %v803 = vadd.f32 %v108, %v802
  %v804 = vpop.f32.mrb[0].mxu0
  %805 = vmatprep.mubr.bf16.mxu0 %v538
  %806 = vmatmul.mubr.bf16.gmra.mrb[0].mxu0 %v358
  %v807 = vpop.f32.mrb[0].mxu0
  %v808 = vadd.f32 %v108, %v807
  %v809 = vpop.f32.mrb[0].mxu0
  %v810 = vpop.f32.mrb[0].mxu0
  %v811 = vadd.f32 %v108, %v810
  %v812 = vpop.f32.mrb[0].mxu0
  %813 = vmatprep.mubr.bf16.mxu0 %v541
  %814 = vmatmul.mubr.bf16.gmra.mrb[0].mxu0 %v360
  %v815 = vpop.f32.mrb[0].mxu0
  %v816 = vadd.f32 %v108, %v815
  %v817 = vpop.f32.mrb[0].mxu0
  %v818 = vpop.f32.mrb[0].mxu0
  %v819 = vadd.f32 %v108, %v818
  %v820 = vpop.f32.mrb[0].mxu0
  %821 = vmatprep.mubr.bf16.mxu0 %v544
  %822 = vmatmul.mubr.bf16.gmra.mrb[0].mxu0 %v362
  %v823 = vpop.f32.mrb[0].mxu0
  %v824 = vadd.f32 %v108, %v823
  %v825 = vpop.f32.mrb[0].mxu0
  %v826 = vpop.f32.mrb[0].mxu0
  %v827 = vadd.f32 %v108, %v826
  %v828 = vpop.f32.mrb[0].mxu0
  %829 = vmatprep.mubr.bf16.mxu0 %v547
  %830 = vmatmul.mubr.bf16.gmra.mrb[0].mxu0 %v364
  %v831 = vpop.f32.mrb[0].mxu0
  %v832 = vadd.f32 %v108, %v831
  %v833 = vpop.f32.mrb[0].mxu0
  %v834 = vpop.f32.mrb[0].mxu0
  %v835 = vadd.f32 %v108, %v834
  %v836 = vpop.f32.mrb[0].mxu0
  %837 = vdwg.mxu0
  %v838 = vld [vmem:[%s4] sm:$0xf]
  %v839 = vld [vmem:[%s4 + $0x4] sm:$0xf]
  %v840 = vld [vmem:[%s4 + $0x8] sm:$0xf]
  %v841 = vld [vmem:[%s4 + $0xc] sm:$0xf]
  %v842 = vld [vmem:[%s4 + $0x10] sm:$0xf]
  %v843 = vld [vmem:[%s4 + $0x14] sm:$0xf]
  %v844 = vld [vmem:[%s4 + $0x18] sm:$0xf]
  %v845 = vld [vmem:[%s4 + $0x1c] sm:$0xf]
  %v846 = vld [vmem:[%s4 + $0x20] sm:$0xf]
  %v847 = vld [vmem:[%s4 + $0x24] sm:$0xf]
  %v848 = vld [vmem:[%s4 + $0x28] sm:$0xf]
  %v849 = vld [vmem:[%s4 + $0x2c] sm:$0xf]
  %v850 = vld [vmem:[%s4 + $0x30] sm:$0xf]
  %v851 = vld [vmem:[%s4 + $0x34] sm:$0xf]
  %v852 = vld [vmem:[%s4 + $0x38] sm:$0xf]
  %v853 = vld [vmem:[%s4 + $0x3c] sm:$0xf]
  %v854 = vld [vmem:[%s4 + $0x40] sm:$0xf]
  %v855 = vld [vmem:[%s4 + $0x44] sm:$0xf]
  %v856 = vld [vmem:[%s4 + $0x48] sm:$0xf]
  %v857 = vld [vmem:[%s4 + $0x4c] sm:$0xf]
  %v858 = vld [vmem:[%s4 + $0x50] sm:$0xf]
  %v859 = vld [vmem:[%s4 + $0x54] sm:$0xf]
  %v860 = vld [vmem:[%s4 + $0x58] sm:$0xf]
  %v861 = vld [vmem:[%s4 + $0x5c] sm:$0xf]
  %v862 = vld [vmem:[%s4 + $0x60] sm:$0xf]
  %v863 = vld [vmem:[%s4 + $0x64] sm:$0xf]
  %v864 = vld [vmem:[%s4 + $0x68] sm:$0xf]
  %v865 = vld [vmem:[%s4 + $0x6c] sm:$0xf]
  %v866 = vld [vmem:[%s4 + $0x70] sm:$0xf]
  %v867 = vld [vmem:[%s4 + $0x74] sm:$0xf]
  %v868 = vld [vmem:[%s4 + $0x78] sm:$0xf]
  %v869 = vld [vmem:[%s4 + $0x7c] sm:$0xf]
  %v870 = vld [vmem:[%s4 + $0x80] sm:$0xf]
  %v871 = vld [vmem:[%s4 + $0x84] sm:$0xf]
  %v872 = vld [vmem:[%s4 + $0x88] sm:$0xf]
  %v873 = vld [vmem:[%s4 + $0x8c] sm:$0xf]
  %v874 = vld [vmem:[%s4 + $0x90] sm:$0xf]
  %v875 = vld [vmem:[%s4 + $0x94] sm:$0xf]
  %v876 = vld [vmem:[%s4 + $0x98] sm:$0xf]
  %v877 = vld [vmem:[%s4 + $0x9c] sm:$0xf]
  %v878 = vld [vmem:[%s4 + $0xa0] sm:$0xf]
  %v879 = vld [vmem:[%s4 + $0xa4] sm:$0xf]
  %v880 = vld [vmem:[%s4 + $0xa8] sm:$0xf]
  %v881 = vld [vmem:[%s4 + $0xac] sm:$0xf]
  %v882 = vld [vmem:[%s4 + $0xb0] sm:$0xf]
  %v883 = vld [vmem:[%s4 + $0xb4] sm:$0xf]
  %v884 = vld [vmem:[%s4 + $0xb8] sm:$0xf]
  %v885 = vld [vmem:[%s4 + $0xbc] sm:$0xf]
  %v886 = vld [vmem:[%s4 + $0xc0] sm:$0xf]
  %v887 = vld [vmem:[%s4 + $0xc4] sm:$0xf]
  %v888 = vld [vmem:[%s4 + $0xc8] sm:$0xf]
  %v889 = vld [vmem:[%s4 + $0xcc] sm:$0xf]
  %v890 = vld [vmem:[%s4 + $0xd0] sm:$0xf]
  %v891 = vld [vmem:[%s4 + $0xd4] sm:$0xf]
  %v892 = vld [vmem:[%s4 + $0xd8] sm:$0xf]
  %v893 = vld [vmem:[%s4 + $0xdc] sm:$0xf]
  %v894 = vld [vmem:[%s4 + $0xe0] sm:$0xf]
  %v895 = vld [vmem:[%s4 + $0xe4] sm:$0xf]
  %v896 = vld [vmem:[%s4 + $0xe8] sm:$0xf]
  %v897 = vld [vmem:[%s4 + $0xec] sm:$0xf]
  %v898 = vld [vmem:[%s4 + $0xf0] sm:$0xf]
  %v899 = vld [vmem:[%s4 + $0xf4] sm:$0xf]
  %v900 = vld [vmem:[%s4 + $0xf8] sm:$0xf]
  %v901 = vld [vmem:[%s4 + $0xfc] sm:$0xf]
  %v902 = vunpack.c.l.bf16 %v838
  %v903 = vunpack.c.l.bf16 %v839
  %v904 = vunpack.c.l.bf16 %v840
  %v905 = vunpack.c.l.bf16 %v841
  %v906 = vunpack.c.l.bf16 %v842
  %v907 = vunpack.c.l.bf16 %v843
  %v908 = vunpack.c.l.bf16 %v844
  %v909 = vunpack.c.l.bf16 %v845
  %v910 = vunpack.c.l.bf16 %v846
  %v911 = vunpack.c.l.bf16 %v847
  %v912 = vunpack.c.l.bf16 %v848
  %v913 = vunpack.c.l.bf16 %v849
  %v914 = vunpack.c.l.bf16 %v850
  %v915 = vunpack.c.l.bf16 %v851
  %v916 = vunpack.c.l.bf16 %v852
  %v917 = vunpack.c.l.bf16 %v853
  %v918 = vunpack.c.l.bf16 %v854
  %v919 = vunpack.c.l.bf16 %v855
  %v920 = vunpack.c.l.bf16 %v856
  %v921 = vunpack.c.l.bf16 %v857
  %v922 = vunpack.c.l.bf16 %v858
  %v923 = vunpack.c.l.bf16 %v859
  %v924 = vunpack.c.l.bf16 %v860
  %v925 = vunpack.c.l.bf16 %v861
  %v926 = vunpack.c.l.bf16 %v862
  %v927 = vunpack.c.l.bf16 %v863
  %v928 = vunpack.c.l.bf16 %v864
  %v929 = vunpack.c.l.bf16 %v865
  %v930 = vunpack.c.l.bf16 %v866
  %v931 = vunpack.c.l.bf16 %v867
  %v932 = vunpack.c.l.bf16 %v868
  %v933 = vunpack.c.l.bf16 %v869
  %v934 = vunpack.c.l.bf16 %v870
  %v935 = vunpack.c.l.bf16 %v871
  %v936 = vunpack.c.l.bf16 %v872
  %v937 = vunpack.c.l.bf16 %v873
  %v938 = vunpack.c.l.bf16 %v874
  %v939 = vunpack.c.l.bf16 %v875
  %v940 = vunpack.c.l.bf16 %v876
  %v941 = vunpack.c.l.bf16 %v877
  %v942 = vunpack.c.l.bf16 %v878
  %v943 = vunpack.c.l.bf16 %v879
  %v944 = vunpack.c.l.bf16 %v880
  %v945 = vunpack.c.l.bf16 %v881
  %v946 = vunpack.c.l.bf16 %v882
  %v947 = vunpack.c.l.bf16 %v883
  %v948 = vunpack.c.l.bf16 %v884
  %v949 = vunpack.c.l.bf16 %v885
  %v950 = vunpack.c.l.bf16 %v886
  %v951 = vunpack.c.l.bf16 %v887
  %v952 = vunpack.c.l.bf16 %v888
  %v953 = vunpack.c.l.bf16 %v889
  %v954 = vunpack.c.l.bf16 %v890
  %v955 = vunpack.c.l.bf16 %v891
  %v956 = vunpack.c.l.bf16 %v892
  %v957 = vunpack.c.l.bf16 %v893
  %v958 = vunpack.c.l.bf16 %v894
  %v959 = vunpack.c.l.bf16 %v895
  %v960 = vunpack.c.l.bf16 %v896
  %v961 = vunpack.c.l.bf16 %v897
  %v962 = vunpack.c.l.bf16 %v898
  %v963 = vunpack.c.l.bf16 %v899
  %v964 = vunpack.c.l.bf16 %v900
  %v965 = vunpack.c.l.bf16 %v901
  %v966 = vadd.f32 %v584, %v902
  %v967 = vadd.f32 %v587, %v903
  %v968 = vadd.f32 %v592, %v904
  %v969 = vadd.f32 %v595, %v905
  %v970 = vadd.f32 %v600, %v906
  %v971 = vadd.f32 %v603, %v907
  %v972 = vadd.f32 %v608, %v908
  %v973 = vadd.f32 %v611, %v909
  %v974 = vadd.f32 %v616, %v910
  %v975 = vadd.f32 %v619, %v911
  %v976 = vadd.f32 %v624, %v912
  %v977 = vadd.f32 %v627, %v913
  %v978 = vadd.f32 %v632, %v914
  %v979 = vadd.f32 %v635, %v915
  %v980 = vadd.f32 %v640, %v916
  %v981 = vadd.f32 %v643, %v917
  %v982 = vadd.f32 %v648, %v918
  %v983 = vadd.f32 %v651, %v919
  %v984 = vadd.f32 %v656, %v920
  %v985 = vadd.f32 %v659, %v921
  %v986 = vadd.f32 %v664, %v922
  %v987 = vadd.f32 %v667, %v923
  %v988 = vadd.f32 %v672, %v924
  %v989 = vadd.f32 %v675, %v925
  %v990 = vadd.f32 %v680, %v926
  %v991 = vadd.f32 %v683, %v927
  %v992 = vadd.f32 %v688, %v928
  %v993 = vadd.f32 %v691, %v929
  %v994 = vadd.f32 %v696, %v930
  %v995 = vadd.f32 %v699, %v931
  %v996 = vadd.f32 %v704, %v932
  %v997 = vadd.f32 %v707, %v933
  %v998 = vadd.f32 %v712, %v934
  %v999 = vadd.f32 %v715, %v935
  %v1000 = vadd.f32 %v720, %v936
  %v1001 = vadd.f32 %v723, %v937
  %v1002 = vadd.f32 %v728, %v938
  %v1003 = vadd.f32 %v731, %v939
  %v1004 = vadd.f32 %v736, %v940
  %v1005 = vadd.f32 %v739, %v941
  %v1006 = vadd.f32 %v744, %v942
  %v1007 = vadd.f32 %v747, %v943
  %v1008 = vadd.f32 %v752, %v944
  %v1009 = vadd.f32 %v755, %v945
  %v1010 = vadd.f32 %v760, %v946
  %v1011 = vadd.f32 %v763, %v947
  %v1012 = vadd.f32 %v768, %v948
  %v1013 = vadd.f32 %v771, %v949
  %v1014 = vadd.f32 %v776, %v950
  %v1015 = vadd.f32 %v779, %v951
  %v1016 = vadd.f32 %v784, %v952
  %v1017 = vadd.f32 %v787, %v953
  %v1018 = vadd.f32 %v792, %v954
  %v1019 = vadd.f32 %v795, %v955
  %v1020 = vadd.f32 %v800, %v956
  %v1021 = vadd.f32 %v803, %v957
  %v1022 = vadd.f32 %v808, %v958
  %v1023 = vadd.f32 %v811, %v959
  %v1024 = vadd.f32 %v816, %v960
  %v1025 = vadd.f32 %v819, %v961
  %v1026 = vadd.f32 %v824, %v962
  %v1027 = vadd.f32 %v827, %v963
  %v1028 = vadd.f32 %v832, %v964
  %v1029 = vadd.f32 %v835, %v965
  %v1030 = vmax.f32 %v966, 0.0
  %v1031 = vmax.f32 %v967, 0.0
  %v1032 = vmax.f32 %v968, 0.0
  %v1033 = vmax.f32 %v969, 0.0
  %v1034 = vmax.f32 %v970, 0.0
  %v1035 = vmax.f32 %v971, 0.0
  %v1036 = vmax.f32 %v972, 0.0
  %v1037 = vmax.f32 %v973, 0.0
  %v1038 = vmax.f32 %v974, 0.0
  %v1039 = vmax.f32 %v975, 0.0
  %v1040 = vmax.f32 %v976, 0.0
  %v1041 = vmax.f32 %v977, 0.0
  %v1042 = vmax.f32 %v978, 0.0
  %v1043 = vmax.f32 %v979, 0.0
  %v1044 = vmax.f32 %v980, 0.0
  %v1045 = vmax.f32 %v981, 0.0
  %v1046 = vmax.f32 %v982, 0.0
  %v1047 = vmax.f32 %v983, 0.0
  %v1048 = vmax.f32 %v984, 0.0
  %v1049 = vmax.f32 %v985, 0.0
  %v1050 = vmax.f32 %v986, 0.0
  %v1051 = vmax.f32 %v987, 0.0
  %v1052 = vmax.f32 %v988, 0.0
  %v1053 = vmax.f32 %v989, 0.0
  %v1054 = vmax.f32 %v990, 0.0
  %v1055 = vmax.f32 %v991, 0.0
  %v1056 = vmax.f32 %v992, 0.0
  %v1057 = vmax.f32 %v993, 0.0
  %v1058 = vmax.f32 %v994, 0.0
  %v1059 = vmax.f32 %v995, 0.0
  %v1060 = vmax.f32 %v996, 0.0
  %v1061 = vmax.f32 %v997, 0.0
  %v1062 = vmax.f32 %v998, 0.0
  %v1063 = vmax.f32 %v999, 0.0
  %v1064 = vmax.f32 %v1000, 0.0
  %v1065 = vmax.f32 %v1001, 0.0
  %v1066 = vmax.f32 %v1002, 0.0
  %v1067 = vmax.f32 %v1003, 0.0
  %v1068 = vmax.f32 %v1004, 0.0
  %v1069 = vmax.f32 %v1005, 0.0
  %v1070 = vmax.f32 %v1006, 0.0
  %v1071 = vmax.f32 %v1007, 0.0
  %v1072 = vmax.f32 %v1008, 0.0
  %v1073 = vmax.f32 %v1009, 0.0
  %v1074 = vmax.f32 %v1010, 0.0
  %v1075 = vmax.f32 %v1011, 0.0
  %v1076 = vmax.f32 %v1012, 0.0
  %v1077 = vmax.f32 %v1013, 0.0
  %v1078 = vmax.f32 %v1014, 0.0
  %v1079 = vmax.f32 %v1015, 0.0
  %v1080 = vmax.f32 %v1016, 0.0
  %v1081 = vmax.f32 %v1017, 0.0
  %v1082 = vmax.f32 %v1018, 0.0
  %v1083 = vmax.f32 %v1019, 0.0
  %v1084 = vmax.f32 %v1020, 0.0
  %v1085 = vmax.f32 %v1021, 0.0
  %v1086 = vmax.f32 %v1022, 0.0
  %v1087 = vmax.f32 %v1023, 0.0
  %v1088 = vmax.f32 %v1024, 0.0
  %v1089 = vmax.f32 %v1025, 0.0
  %v1090 = vmax.f32 %v1026, 0.0
  %v1091 = vmax.f32 %v1027, 0.0
  %v1092 = vmax.f32 %v1028, 0.0
  %v1093 = vmax.f32 %v1029, 0.0
  %v1094 = vld [vmem:[%s3] sm:$0x1]
  %v1096 = vlaneseq
  %v1097 = vshrl.u32 %v1096, 7
  %v1098 = vsub.s32 0, %v1097
  %v1099 = vrot.slane %v1094, %v1098
  %v1101 = vmul.f32 %v1030, %v1099
  %v1102 = vmul.f32 %v1031, %v1099
  %v1103 = vmul.f32 %v1032, %v1099
  %v1104 = vmul.f32 %v1033, %v1099
  %v1105 = vmul.f32 %v1034, %v1099
  %v1106 = vmul.f32 %v1035, %v1099
  %v1107 = vmul.f32 %v1036, %v1099
  %v1108 = vmul.f32 %v1037, %v1099
  %v1109 = vmul.f32 %v1038, %v1099
  %v1110 = vmul.f32 %v1039, %v1099
  %v1111 = vmul.f32 %v1040, %v1099
  %v1112 = vmul.f32 %v1041, %v1099
  %v1113 = vmul.f32 %v1042, %v1099
  %v1114 = vmul.f32 %v1043, %v1099
  %v1115 = vmul.f32 %v1044, %v1099
  %v1116 = vmul.f32 %v1045, %v1099
  %v1117 = vmul.f32 %v1046, %v1099
  %v1118 = vmul.f32 %v1047, %v1099
  %v1119 = vmul.f32 %v1048, %v1099
  %v1120 = vmul.f32 %v1049, %v1099
  %v1121 = vmul.f32 %v1050, %v1099
  %v1122 = vmul.f32 %v1051, %v1099
  %v1123 = vmul.f32 %v1052, %v1099
  %v1124 = vmul.f32 %v1053, %v1099
  %v1125 = vmul.f32 %v1054, %v1099
  %v1126 = vmul.f32 %v1055, %v1099
  %v1127 = vmul.f32 %v1056, %v1099
  %v1128 = vmul.f32 %v1057, %v1099
  %v1129 = vmul.f32 %v1058, %v1099
  %v1130 = vmul.f32 %v1059, %v1099
  %v1131 = vmul.f32 %v1060, %v1099
  %v1132 = vmul.f32 %v1061, %v1099
  %v1133 = vmul.f32 %v1062, %v1099
  %v1134 = vmul.f32 %v1063, %v1099
  %v1135 = vmul.f32 %v1064, %v1099
  %v1136 = vmul.f32 %v1065, %v1099
  %v1137 = vmul.f32 %v1066, %v1099
  %v1138 = vmul.f32 %v1067, %v1099
  %v1139 = vmul.f32 %v1068, %v1099
  %v1140 = vmul.f32 %v1069, %v1099
  %v1141 = vmul.f32 %v1070, %v1099
  %v1142 = vmul.f32 %v1071, %v1099
  %v1143 = vmul.f32 %v1072, %v1099
  %v1144 = vmul.f32 %v1073, %v1099
  %v1145 = vmul.f32 %v1074, %v1099
  %v1146 = vmul.f32 %v1075, %v1099
  %v1147 = vmul.f32 %v1076, %v1099
  %v1148 = vmul.f32 %v1077, %v1099
  %v1149 = vmul.f32 %v1078, %v1099
  %v1150 = vmul.f32 %v1079, %v1099
  %v1151 = vmul.f32 %v1080, %v1099
  %v1152 = vmul.f32 %v1081, %v1099
  %v1153 = vmul.f32 %v1082, %v1099
  %v1154 = vmul.f32 %v1083, %v1099
  %v1155 = vmul.f32 %v1084, %v1099
  %v1156 = vmul.f32 %v1085, %v1099
  %v1157 = vmul.f32 %v1086, %v1099
  %v1158 = vmul.f32 %v1087, %v1099
  %v1159 = vmul.f32 %v1088, %v1099
  %v1160 = vmul.f32 %v1089, %v1099
  %v1161 = vmul.f32 %v1090, %v1099
  %v1162 = vmul.f32 %v1091, %v1099
  %v1163 = vmul.f32 %v1092, %v1099
  %v1164 = vmul.f32 %v1093, %v1099
  %1165 = vst [vmem:[%s5] sm:$0xff] %v1101
  %1166 = vst [vmem:[%s5 + $0x8] sm:$0xff] %v1102
  %1167 = vst [vmem:[%s5 + $0x10] sm:$0xff] %v1103
  %1168 = vst [vmem:[%s5 + $0x18] sm:$0xff] %v1104
  %1169 = vst [vmem:[%s5 + $0x20] sm:$0xff] %v1105
  %1170 = vst [vmem:[%s5 + $0x28] sm:$0xff] %v1106
  %1171 = vst [vmem:[%s5 + $0x30] sm:$0xff] %v1107
  %1172 = vst [vmem:[%s5 + $0x38] sm:$0xff] %v1108
  %1173 = vst [vmem:[%s5 + $0x40] sm:$0xff] %v1109
  %1174 = vst [vmem:[%s5 + $0x48] sm:$0xff] %v1110
  %1175 = vst [vmem:[%s5 + $0x50] sm:$0xff] %v1111
  %1176 = vst [vmem:[%s5 + $0x58] sm:$0xff] %v1112
  %1177 = vst [vmem:[%s5 + $0x60] sm:$0xff] %v1113
  %1178 = vst [vmem:[%s5 + $0x68] sm:$0xff] %v1114
  %1179 = vst [vmem:[%s5 + $0x70] sm:$0xff] %v1115
  %1180 = vst [vmem:[%s5 + $0x78] sm:$0xff] %v1116
  %1181 = vst [vmem:[%s5 + $0x80] sm:$0xff] %v1117
  %1182 = vst [vmem:[%s5 + $0x88] sm:$0xff] %v1118
  %1183 = vst [vmem:[%s5 + $0x90] sm:$0xff] %v1119
  %1184 = vst [vmem:[%s5 + $0x98] sm:$0xff] %v1120
  %1185 = vst [vmem:[%s5 + $0xa0] sm:$0xff] %v1121
  %1186 = vst [vmem:[%s5 + $0xa8] sm:$0xff] %v1122
  %1187 = vst [vmem:[%s5 + $0xb0] sm:$0xff] %v1123
  %1188 = vst [vmem:[%s5 + $0xb8] sm:$0xff] %v1124
  %1189 = vst [vmem:[%s5 + $0xc0] sm:$0xff] %v1125
  %1190 = vst [vmem:[%s5 + $0xc8] sm:$0xff] %v1126
  %1191 = vst [vmem:[%s5 + $0xd0] sm:$0xff] %v1127
  %1192 = vst [vmem:[%s5 + $0xd8] sm:$0xff] %v1128
  %1193 = vst [vmem:[%s5 + $0xe0] sm:$0xff] %v1129
  %1194 = vst [vmem:[%s5 + $0xe8] sm:$0xff] %v1130
  %1195 = vst [vmem:[%s5 + $0xf0] sm:$0xff] %v1131
  %1196 = vst [vmem:[%s5 + $0xf8] sm:$0xff] %v1132
  %1197 = vst [vmem:[%s5 + $0x100] sm:$0xff] %v1133
  %1198 = vst [vmem:[%s5 + $0x108] sm:$0xff] %v1134
  %1199 = vst [vmem:[%s5 + $0x110] sm:$0xff] %v1135
  %1200 = vst [vmem:[%s5 + $0x118] sm:$0xff] %v1136
  %1201 = vst [vmem:[%s5 + $0x120] sm:$0xff] %v1137
  %1202 = vst [vmem:[%s5 + $0x128] sm:$0xff] %v1138
  %1203 = vst [vmem:[%s5 + $0x130] sm:$0xff] %v1139
  %1204 = vst [vmem:[%s5 + $0x138] sm:$0xff] %v1140
  %1205 = vst [vmem:[%s5 + $0x140] sm:$0xff] %v1141
  %1206 = vst [vmem:[%s5 + $0x148] sm:$0xff] %v1142
  %1207 = vst [vmem:[%s5 + $0x150] sm:$0xff] %v1143
  %1208 = vst [vmem:[%s5 + $0x158] sm:$0xff] %v1144
  %1209 = vst [vmem:[%s5 + $0x160] sm:$0xff] %v1145
  %1210 = vst [vmem:[%s5 + $0x168] sm:$0xff] %v1146
  %1211 = vst [vmem:[%s5 + $0x170] sm:$0xff] %v1147
  %1212 = vst [vmem:[%s5 + $0x178] sm:$0xff] %v1148
  %1213 = vst [vmem:[%s5 + $0x180] sm:$0xff] %v1149
  %1214 = vst [vmem:[%s5 + $0x188] sm:$0xff] %v1150
  %1215 = vst [vmem:[%s5 + $0x190] sm:$0xff] %v1151
  %1216 = vst [vmem:[%s5 + $0x198] sm:$0xff] %v1152
  %1217 = vst [vmem:[%s5 + $0x1a0] sm:$0xff] %v1153
  %1218 = vst [vmem:[%s5 + $0x1a8] sm:$0xff] %v1154
  %1219 = vst [vmem:[%s5 + $0x1b0] sm:$0xff] %v1155
  %1220 = vst [vmem:[%s5 + $0x1b8] sm:$0xff] %v1156
  %1221 = vst [vmem:[%s5 + $0x1c0] sm:$0xff] %v1157
  %1222 = vst [vmem:[%s5 + $0x1c8] sm:$0xff] %v1158
  %1223 = vst [vmem:[%s5 + $0x1d0] sm:$0xff] %v1159
  %1224 = vst [vmem:[%s5 + $0x1d8] sm:$0xff] %v1160
  %1225 = vst [vmem:[%s5 + $0x1e0] sm:$0xff] %v1161
  %1226 = vst [vmem:[%s5 + $0x1e8] sm:$0xff] %v1162
  %1227 = vst [vmem:[%s5 + $0x1f0] sm:$0xff] %v1163
  %1228 = vst [vmem:[%s5 + $0x1f8] sm:$0xff] %v1164
  // Predicated region
  $region22: #{_lambda_.3} parent=0 // pred_check
    _
  $region23: #{_lambda_.3} parent=0 // pred_check_branch
    %1230 = sbr.rel (0) target = $region25
  $region24: #{_lambda_.3} parent=0 // pred_region
    _
  $region25: #{_lambda_.3} parent=0 // pred_fallthru
    _
  // Predicated region
  $region26: #{_lambda_.3} parent=0 // pred_check
    _
  $region27: #{_lambda_.3} parent=0 // pred_check_branch
    %1232 = sbr.rel (0) target = $region29
  $region28: #{_lambda_.3} parent=0 // pred_region
    _
  $region29: #{_lambda_.3} parent=0 // pred_fallthru
    _

</llo_original>
